<compile_context>
chip_gen: v7x
topology: tpu7x:2x2x1
jax: 0.10.0
libtpu: 0.0.40
codegen_flags: <defaults>
</compile_context>

<pallas_src>
import functools

import jax
import jax.numpy as jnp
from jax import lax
from jax.experimental import pallas as pl
from jax.experimental.pallas import tpu as pltpu

EPS = 1.1920929e-07          # torch.finfo(float32).eps — matches nn.RMSNorm(eps=None)
NEG_BIG = -1e30              # finite init for the online-softmax running max
VMEM_LIMIT_BYTES = 48 * 1024 * 1024   # > v5e/v6e scoped defaults, < v7x physical 64 MiB


def _pick_tile(n, candidates):
    """Largest candidate that evenly divides n, else n itself (full dim)."""
    for c in candidates:
        if n >= c and n % c == 0:
            return c
    return n


def _mm_params():
    return pltpu.CompilerParams(
        dimension_semantics=("parallel", "parallel", "arbitrary"),
        vmem_limit_bytes=VMEM_LIMIT_BYTES)


# --------------------------------------------------------------------------
# Tiled linear kernels: bf16 operands straight onto the MXU, f32 accumulation,
# bias (+ optional residual) in the epilogue.  Inputs are expected in bf16.
# --------------------------------------------------------------------------
def _linear_kernel(x_ref, w_ref, b_ref, o_ref, acc_ref):
    k = pl.program_id(2)

    @pl.when(k == 0)
    def _():
        acc_ref[...] = jnp.zeros_like(acc_ref)

    acc_ref[...] += jnp.dot(x_ref[...], w_ref[...],
                            preferred_element_type=jnp.float32)

    @pl.when(k == pl.num_programs(2) - 1)
    def _():
        o_ref[...] = (acc_ref[...] + b_ref[...]).astype(o_ref.dtype)


def _linear_residual_kernel(x_ref, w_ref, b_ref, r_ref, o_ref, acc_ref):
    k = pl.program_id(2)

    @pl.when(k == 0)
    def _():
        acc_ref[...] = jnp.zeros_like(acc_ref)

    acc_ref[...] += jnp.dot(x_ref[...], w_ref[...],
                            preferred_element_type=jnp.float32)

    @pl.when(k == pl.num_programs(2) - 1)
    def _():
        o_ref[...] = (acc_ref[...] + b_ref[...]
                      + r_ref[...].astype(jnp.float32)).astype(o_ref.dtype)


def linear(x, w, b, *, residual=None, out_dtype=jnp.float32):
    x = x.astype(jnp.bfloat16)          # no-op at call sites (already bf16)
    w = w.astype(jnp.bfloat16)
    M, K = x.shape
    N = w.shape[1]
    tm = _pick_tile(M, (512, 256, 128, 64, 32, 16, 8))
    tn = _pick_tile(N, (1024, 512, 256, 128))
    tk = _pick_tile(K, (512, 256, 128))
    grid = (M // tm, N // tn, K // tk)

    x_spec = pl.BlockSpec((tm, tk), lambda i, j, k: (i, k))
    w_spec = pl.BlockSpec((tk, tn), lambda i, j, k: (k, j))
    b_spec = pl.BlockSpec((1, tn), lambda i, j, k: (0, j))
    o_spec = pl.BlockSpec((tm, tn), lambda i, j, k: (i, j))
    scratch = [pltpu.VMEM((tm, tn), jnp.float32)]
    b2 = b.reshape(1, N)

    if residual is None:
        return pl.pallas_call(
            _linear_kernel,
            out_shape=jax.ShapeDtypeStruct((M, N), out_dtype),
            grid=grid,
            in_specs=[x_spec, w_spec, b_spec],
            out_specs=o_spec,
            scratch_shapes=scratch,
            compiler_params=_mm_params(),
        )(x, w, b2)

    r_spec = pl.BlockSpec((tm, tn), lambda i, j, k: (i, j))
    return pl.pallas_call(
        _linear_residual_kernel,
        out_shape=jax.ShapeDtypeStruct((M, N), out_dtype),
        grid=grid,
        in_specs=[x_spec, w_spec, b_spec, r_spec],
        out_specs=o_spec,
        scratch_shapes=scratch,
        compiler_params=_mm_params(),
    )(x, w, b2, residual)


# --------------------------------------------------------------------------
# Fused FFN up-projection + SwiGLU:  silu(x@w1 + b1) * (x@w2 + b2)
# --------------------------------------------------------------------------
def _ffn_up_kernel(x_ref, w1_ref, b1_ref, w2_ref, b2_ref, o_ref, acc_a, acc_g):
    k = pl.program_id(2)

    @pl.when(k == 0)
    def _():
        acc_a[...] = jnp.zeros_like(acc_a)
        acc_g[...] = jnp.zeros_like(acc_g)

    xb = x_ref[...]
    acc_a[...] += jnp.dot(xb, w1_ref[...], preferred_element_type=jnp.float32)
    acc_g[...] += jnp.dot(xb, w2_ref[...], preferred_element_type=jnp.float32)

    @pl.when(k == pl.num_programs(2) - 1)
    def _():
        a = acc_a[...] + b1_ref[...]
        g = acc_g[...] + b2_ref[...]
        o_ref[...] = (a * jax.nn.sigmoid(a) * g).astype(o_ref.dtype)


def ffn_up(x, w1, b1, w2, b2):
    x = x.astype(jnp.bfloat16)
    M, K = x.shape
    N = w1.shape[1]
    tm = _pick_tile(M, (512, 256, 128, 64, 32, 16, 8))
    tn = _pick_tile(N, (1024, 512, 256, 128))
    tk = _pick_tile(K, (512, 256, 128))
    grid = (M // tm, N // tn, K // tk)

    x_spec = pl.BlockSpec((tm, tk), lambda i, j, k: (i, k))
    w_spec = pl.BlockSpec((tk, tn), lambda i, j, k: (k, j))
    b_spec = pl.BlockSpec((1, tn), lambda i, j, k: (0, j))
    o_spec = pl.BlockSpec((tm, tn), lambda i, j, k: (i, j))

    return pl.pallas_call(
        _ffn_up_kernel,
        out_shape=jax.ShapeDtypeStruct((M, N), jnp.bfloat16),
        grid=grid,
        in_specs=[x_spec, w_spec, b_spec, w_spec, b_spec],
        out_specs=o_spec,
        scratch_shapes=[pltpu.VMEM((tm, tn), jnp.float32),
                        pltpu.VMEM((tm, tn), jnp.float32)],
        compiler_params=_mm_params(),
    )(x, w1, b1.reshape(1, N), w2, b2.reshape(1, N))


# --------------------------------------------------------------------------
# RMSNorm (row-tiled, f32 math, bf16 output).  Row tile capped at 128 so the
# f32 input block stays small on v5e's 16 MiB default scoped VMEM.
# --------------------------------------------------------------------------
def _rmsnorm_kernel(x_ref, w_ref, o_ref):
    x = x_ref[...].astype(jnp.float32)
    ms = jnp.mean(x * x, axis=-1, keepdims=True)
    o_ref[...] = (x * lax.rsqrt(ms + EPS)
                  * w_ref[...].astype(jnp.float32)).astype(o_ref.dtype)


def rmsnorm(x, w, *, out_dtype=jnp.bfloat16):
    M, D = x.shape
    tm = _pick_tile(M, (128, 64, 32, 16, 8))
    return pl.pallas_call(
        _rmsnorm_kernel,
        out_shape=jax.ShapeDtypeStruct((M, D), out_dtype),
        grid=(M // tm,),
        in_specs=[pl.BlockSpec((tm, D), lambda i: (i, 0)),
                  pl.BlockSpec((1, D), lambda i: (0, 0))],
        out_specs=pl.BlockSpec((tm, D), lambda i: (i, 0)),
        compiler_params=pltpu.CompilerParams(
            dimension_semantics=("parallel",),
            vmem_limit_bytes=VMEM_LIMIT_BYTES),
    )(x, w.reshape(1, D))


# --------------------------------------------------------------------------
# Banded flash sliding-window attention with fused RoPE + query scaling.
#   grid = (B, num_q_tiles, num_kv_tiles_in_band); all H heads per step.
#   * Q tile is rotated + scaled ONCE per (b, qi) into a bf16 scratch.
#   * K tiles are rotated in-kernel each step (VPU/MXU work that overlaps).
#   * rotate-half is computed as t @ R with a constant (d, d) ±1 matrix —
#     avoids in-kernel lane shuffles.
#   * Only boundary tiles pay for the sliding-window mask; interior tiles
#     take an unmasked pl.when branch.
# --------------------------------------------------------------------------
def _swa_kernel(q_ref, k_ref, v_ref, cq_ref, sq_ref, ck_ref, sk_ref, rot_ref,
                o_ref, q_scr, m_scr, l_scr, acc_scr,
                *, window, n_kv, tq, scale):
    qi = pl.program_id(1)
    kj = pl.program_id(2)
    kb = qi - (n_kv - 1) + kj          # un-clamped key-block index
    _, H, _, d = q_ref.shape

    @pl.when(kj == 0)
    def _():
        m_scr[...] = jnp.full_like(m_scr, NEG_BIG)
        l_scr[...] = jnp.zeros_like(l_scr)
        acc_scr[...] = jnp.zeros_like(acc_scr)
        # RoPE + scale the query tile once per (b, qi).
        q = q_ref[0]                                         # (H, tq, d) bf16
        q_rot = jnp.dot(q.reshape(H * tq, d), rot_ref[...],
                        preferred_element_type=jnp.float32).reshape(H, tq, d)
        qf = q.astype(jnp.float32) * cq_ref[...][None] + q_rot * sq_ref[...][None]
        q_scr[...] = (qf * scale).astype(q_scr.dtype)

    off = (n_kv - 1 - kj) * tq                               # q_pos - k_pos tile offset
    in_band = kb >= 0
    # tile fully inside the window  <=>  no masking needed
    full_tile = jnp.logical_and(off >= tq - 1, off + tq - 1 <= window)

    def _update(apply_mask):
        k = k_ref[0]                                         # (H, tq, d) bf16
        k_rot = jnp.dot(k.reshape(H * tq, d), rot_ref[...],
                        preferred_element_type=jnp.float32).reshape(H, tq, d)
        kf = k.astype(jnp.float32) * ck_ref[...][None] + k_rot * sk_ref[...][None]
        kr = kf.astype(jnp.bfloat16)
        v = v_ref[0]

        s = jnp.einsum("hqd,hkd->hqk", q_scr[...], kr,
                       preferred_element_type=jnp.float32)   # (H, tq, tq)
        if apply_mask:
            rel = (lax.broadcasted_iota(jnp.int32, (tq, tq), 0)
                   - lax.broadcasted_iota(jnp.int32, (tq, tq), 1)) + off
            allowed = (rel >= 0) & (rel <= window)
            s = jnp.where(allowed[None], s, -jnp.inf)

        m_prev = m_scr[...]
        m_new = jnp.maximum(m_prev, jnp.max(s, axis=-1, keepdims=True))
        alpha = jnp.exp(m_prev - m_new)
        p = jnp.exp(s - m_new)                               # masked entries -> exp(-inf)=0
        l_scr[...] = alpha * l_scr[...] + jnp.sum(p, axis=-1, keepdims=True)
        acc_scr[...] = alpha * acc_scr[...] + jnp.einsum(
            "hqk,hkd->hqd", p.astype(v.dtype), v,
            preferred_element_type=jnp.float32)
        m_scr[...] = m_new

    @pl.when(jnp.logical_and(in_band, full_tile))
    def _():
        _update(apply_mask=False)

    @pl.when(jnp.logical_and(in_band, jnp.logical_not(full_tile)))
    def _():
        _update(apply_mask=True)

    @pl.when(kj == n_kv - 1)
    def _():
        o_ref[0] = (acc_scr[...]
                    * pl.reciprocal(l_scr[...], approx=True)).astype(o_ref.dtype)


def sliding_window_attention(q, k, v, cos, sin, rotm, window, scale):
    """q, k, v: (B, H, S, d) bf16 (pre-RoPE, unscaled). cos/sin: (S, d) f32."""
    B, H, S, d = q.shape
    tq = _pick_tile(S, (256, 128))     # 256 fills the v6e/v7x 256-wide MXU
    n_q = S // tq
    n_kv = min(pl.cdiv(window, tq) + 1, n_q)

    kernel = functools.partial(_swa_kernel, window=window, n_kv=n_kv,
                               tq=tq, scale=scale)

    qo_spec = pl.BlockSpec((1, H, tq, d), lambda b, qi, kj: (b, 0, qi, 0))

    def kv_map(b, qi, kj):
        return (b, 0, jnp.maximum(qi - (n_kv - 1) + kj, 0), 0)

    kv_spec = pl.BlockSpec((1, H, tq, d), kv_map)
    cs_q_spec = pl.BlockSpec((tq, d), lambda b, qi, kj: (qi, 0))

    def cs_k_map(b, qi, kj):
        return (jnp.maximum(qi - (n_kv - 1) + kj, 0), 0)

    cs_k_spec = pl.BlockSpec((tq, d), cs_k_map)
    rot_spec = pl.BlockSpec((d, d), lambda b, qi, kj: (0, 0))

    return pl.pallas_call(
        kernel,
        out_shape=jax.ShapeDtypeStruct((B, H, S, d), q.dtype),
        grid=(B, n_q, n_kv),
        in_specs=[qo_spec, kv_spec, kv_spec,
                  cs_q_spec, cs_q_spec, cs_k_spec, cs_k_spec, rot_spec],
        out_specs=qo_spec,
        scratch_shapes=[pltpu.VMEM((H, tq, d), jnp.bfloat16),   # roped+scaled Q
                        pltpu.VMEM((H, tq, 1), jnp.float32),    # running max
                        pltpu.VMEM((H, tq, 1), jnp.float32),    # running sum
                        pltpu.VMEM((H, tq, d), jnp.float32)],   # accumulator
        compiler_params=pltpu.CompilerParams(
            dimension_semantics=("parallel", "parallel", "arbitrary"),
            vmem_limit_bytes=VMEM_LIMIT_BYTES),
    )(q, k, v, cos, sin, cos, sin, rotm)


# --------------------------------------------------------------------------
# Plain-JAX glue: RoPE tables, rotation matrix, parameter init, forward loop
# --------------------------------------------------------------------------
def rope_cos_sin(S, d):
    half = d // 2
    inv_freq = 1.0 / (10000.0 ** (jnp.arange(half, dtype=jnp.float32) / half))
    ang = jnp.arange(S, dtype=jnp.float32)[:, None] * inv_freq[None, :]
    cos = jnp.concatenate([jnp.cos(ang), jnp.cos(ang)], axis=-1)
    sin = jnp.concatenate([jnp.sin(ang), jnp.sin(ang)], axis=-1)
    return cos, sin


def rotate_half_matrix(d):
    """Constant (d, d) matrix R with  t @ R == concat(-t[half:], t[:half])."""
    half = d // 2
    idx = jnp.arange(half)
    r = jnp.zeros((d, d), jnp.float32)
    r = r.at[idx + half, idx].set(-1.0)
    r = r.at[idx, idx + half].set(1.0)
    return r.astype(jnp.bfloat16)


def init_params(key, vocab_size, dim, num_heads, num_layers, ffn_mult):
    ffn_hidden = dim * ffn_mult

    def dense(k, din, dout):
        w = (0.02 * jax.random.normal(k, (din, dout), jnp.float32)
             ).astype(jnp.bfloat16)                # weights live in bf16 in HBM
        b = jnp.zeros((dout,), jnp.float32)
        return w, b

    keys = jax.random.split(key, 2 + num_layers)
    params = {
        "embedding": 0.02 * jax.random.normal(keys[0], (vocab_size, dim), jnp.float32),
        "final_norm_w": jnp.ones((dim,), jnp.float32),
        "layers": [],
    }
    params["logit_w"], params["logit_b"] = dense(keys[1], dim, vocab_size)
    for li in range(num_layers):
        lk = jax.random.split(keys[2 + li], 6)
        lp = {"norm1_w": jnp.ones((dim,), jnp.float32),
              "norm2_w": jnp.ones((dim,), jnp.float32)}
        lp["qkv_w"], lp["qkv_b"] = dense(lk[0], dim, 3 * dim)   # fused Q|K|V
        lp["o_w"], lp["o_b"] = dense(lk[1], dim, dim)
        lp["w1"], lp["b1"] = dense(lk[2], dim, ffn_hidden)      # SwiGLU value
        lp["w2"], lp["b2"] = dense(lk[3], dim, ffn_hidden)      # SwiGLU gate
        lp["w3"], lp["b3"] = dense(lk[4], ffn_hidden, dim)      # down-proj
        params["layers"].append(lp)
    return params


def encoder_forward(params, token_ids, *, dim, num_heads, window_size, vocab_size):
    B, S = token_ids.shape
    H = num_heads
    d = dim // H
    M = B * S
    scale = float(d) ** -0.5

    x = jnp.take(params["embedding"], token_ids, axis=0).reshape(M, dim)  # f32 residual
    cos, sin = rope_cos_sin(S, d)
    rotm = rotate_half_matrix(d)

    def split_heads(t):    # (M, dim) -> (B, H, S, d)   (bf16, single transpose pass)
        return t.reshape(B, S, H, d).transpose(0, 2, 1, 3)

    def merge_heads(t):    # (B, H, S, d) -> (M, dim)
        return t.transpose(0, 2, 1, 3).reshape(M, dim)

    for lp in params["layers"]:
        # --- attention sub-layer (pre-RMSNorm) ---
        h = rmsnorm(x, lp["norm1_w"])                                       # bf16
        qkv = linear(h, lp["qkv_w"], lp["qkv_b"], out_dtype=jnp.bfloat16)   # bf16
        q, k, v = jnp.split(qkv, 3, axis=-1)
        ctx = sliding_window_attention(split_heads(q), split_heads(k), split_heads(v),
                                       cos, sin, rotm, window_size, scale)
        ctx = merge_heads(ctx)                                              # bf16
        x = linear(ctx, lp["o_w"], lp["o_b"], residual=x, out_dtype=jnp.float32)

        # --- FFN sub-layer (pre-RMSNorm, SwiGLU) ---
        h2 = rmsnorm(x, lp["norm2_w"])                                      # bf16
        up = ffn_up(h2, lp["w1"], lp["b1"], lp["w2"], lp["b2"])             # bf16
        x = linear(up, lp["w3"], lp["b3"], residual=x, out_dtype=jnp.float32)

    hidden_states = x.reshape(B, S, dim)
    normed = rmsnorm(x, params["final_norm_w"])
    logits = linear(normed, params["logit_w"], params["logit_b"],
                    out_dtype=jnp.float32).reshape(B, S, vocab_size)
    return hidden_states, logits


# --------------------------------------------------------------------------
# Pure-JAX reference for the attention kernel (used as a numeric sanity check)
# --------------------------------------------------------------------------
def _attn_reference(q, k, v, cos, sin, window, scale):
    qf, kf, vf = (t.astype(jnp.float32) for t in (q, k, v))

    def rope(t):
        half = t.shape[-1] // 2
        rot = jnp.concatenate([-t[..., half:], t[..., :half]], axis=-1)
        return t * cos + rot * sin

    qf = rope(qf) * scale
    kf = rope(kf)
    s = jnp.einsum("bhqd,bhkd->bhqk", qf, kf)
    S = q.shape[2]
    idx = jnp.arange(S)
    rel = idx[:, None] - idx[None, :]                  # q_pos - k_pos
    allowed = (rel >= 0) & (rel <= window)
    s = jnp.where(allowed[None, None], s, -jnp.inf)
    p = jax.nn.softmax(s, axis=-1)
    return jnp.einsum("bhqk,bhkd->bhqd", p, vf)


# --------------------------------------------------------------------------
if __name__ == "__main__":
    VOCAB = 32
    DIM = 32
    HEADS = 4
    WINDOW = 4
    LAYERS = 2
    FFN_MULT = 4
    B, S = 2, 8
    D_HEAD = DIM // HEADS

    key = jax.random.PRNGKey(0)
    k_params, k_tok, k_q, k_k, k_v = jax.random.split(key, 5)
    params = init_params(k_params, VOCAB, DIM, HEADS, LAYERS, FFN_MULT)
    token_ids = jax.random.randint(k_tok, (B, S), 0, VOCAB, dtype=jnp.int32)

    # --- standalone numeric check of the fused-RoPE sliding-window kernel ---
    cos, sin = rope_cos_sin(S, D_HEAD)
    rotm = rotate_half_matrix(D_HEAD)
    scale = float(D_HEAD) ** -0.5
    q_t = (0.5 * jax.random.normal(k_q, (B, HEADS, S, D_HEAD), jnp.float32)).astype(jnp.bfloat16)
    k_t = (0.5 * jax.random.normal(k_k, (B, HEADS, S, D_HEAD), jnp.float32)).astype(jnp.bfloat16)
    v_t = (0.5 * jax.random.normal(k_v, (B, HEADS, S, D_HEAD), jnp.float32)).astype(jnp.bfloat16)
    out_kernel = sliding_window_attention(q_t, k_t, v_t, cos, sin, rotm, WINDOW, scale)
    out_ref = _attn_reference(q_t, k_t, v_t, cos, sin, WINDOW, scale)
    err = float(jnp.max(jnp.abs(out_kernel.astype(jnp.float32) - out_ref)))
    assert err < 3e-2, f"sliding-window attention mismatch: max abs err = {err}"

    # --- full encoder forward ---
    hidden, logits = encoder_forward(
        params, token_ids, dim=DIM, num_heads=HEADS,
        window_size=WINDOW, vocab_size=VOCAB,
    )
    jax.block_until_ready((hidden, logits))
    assert hidden.shape == (B, S, DIM)
    assert logits.shape == (B, S, VOCAB)
    assert bool(jnp.all(jnp.isfinite(hidden))) and bool(jnp.all(jnp.isfinite(logits)))
    print("KERNEL_OK")
</pallas_src>

<mosaic_0001>
module attributes {stable_mosaic.version = 11 : i64} {
  func.func @_swa_kernel(%arg0: i32, %arg1: i32, %arg2: i32, %arg3: memref<1x4x8x8xbf16, #tpu.memory_space<vmem>>, %arg4: memref<1x4x8x8xbf16, #tpu.memory_space<vmem>>, %arg5: memref<1x4x8x8xbf16, #tpu.memory_space<vmem>>, %arg6: memref<8x8xf32, #tpu.memory_space<vmem>>, %arg7: memref<8x8xf32, #tpu.memory_space<vmem>>, %arg8: memref<8x8xf32, #tpu.memory_space<vmem>>, %arg9: memref<8x8xf32, #tpu.memory_space<vmem>>, %arg10: memref<8x8xbf16, #tpu.memory_space<vmem>>, %arg11: memref<1x4x8x8xbf16, #tpu.memory_space<vmem>>, %arg12: memref<4x8x8xbf16, #tpu.memory_space<vmem>>, %arg13: memref<4x8x1xf32, #tpu.memory_space<vmem>>, %arg14: memref<4x8x1xf32, #tpu.memory_space<vmem>>, %arg15: memref<4x8x8xf32, #tpu.memory_space<vmem>>) attributes {dimension_semantics = [#tpu.dimension_semantics<parallel>, #tpu.dimension_semantics<parallel>, #tpu.dimension_semantics<arbitrary>], iteration_bounds = array<i64: 2, 1, 1>, scalar_prefetch = 0 : i64, scratch_operands = 4 : i64, tpu.core_type = #tpu.core_type<tc>, window_params = [{transform_indices = @transform_0, window_bounds = array<i64: 1, 4, 8, 8>}, {transform_indices = @transform_1, window_bounds = array<i64: 1, 4, 8, 8>}, {transform_indices = @transform_2, window_bounds = array<i64: 1, 4, 8, 8>}, {transform_indices = @transform_3, window_bounds = array<i64: 8, 8>}, {transform_indices = @transform_4, window_bounds = array<i64: 8, 8>}, {transform_indices = @transform_5, window_bounds = array<i64: 8, 8>}, {transform_indices = @transform_6, window_bounds = array<i64: 8, 8>}, {pipeline_mode = #tpu.pipeline_mode<synchronous>, transform_indices = @transform_7, window_bounds = array<i64: 8, 8>}, {transform_indices = @transform_8, window_bounds = array<i64: 1, 4, 8, 8>}]} {
    %c0_i32 = arith.constant 0 : i32
    %0 = arith.subi %arg1, %c0_i32 : i32
    %1 = arith.addi %0, %arg2 : i32
    %c0_i32_0 = arith.constant 0 : i32
    %2 = arith.cmpi eq, %arg2, %c0_i32_0 : i32
    %3 = arith.extui %2 : i1 to i32
    %c0_i32_1 = arith.constant 0 : i32
    %4 = arith.cmpi ne, %3, %c0_i32_1 : i32
    scf.if %4 {
      %cst = arith.constant -1.000000e+30 : f32
      %23 = vector.broadcast %cst : f32 to vector<4x8x1xf32>
      %c0 = arith.constant 0 : index
      %c0_9 = arith.constant 0 : index
      %c0_10 = arith.constant 0 : index
      %24 = vector.load %arg13[%c0, %c0_9, %c0_10] : memref<4x8x1xf32, #tpu.memory_space<vmem>>, vector<4x8x1xf32>
      tpu.vector_store %arg13[%c0, %c0_9, %c0_10], %23 {strides = array<i32>} : memref<4x8x1xf32, #tpu.memory_space<vmem>>, vector<4x8x1xf32>,
      %cst_11 = arith.constant 0.000000e+00 : f32
      %25 = vector.broadcast %cst_11 : f32 to vector<4x8x1xf32>
      %c0_12 = arith.constant 0 : index
      %c0_13 = arith.constant 0 : index
      %c0_14 = arith.constant 0 : index
      %26 = vector.load %arg14[%c0_12, %c0_13, %c0_14] : memref<4x8x1xf32, #tpu.memory_space<vmem>>, vector<4x8x1xf32>
      tpu.vector_store %arg14[%c0_12, %c0_13, %c0_14], %25 {strides = array<i32>} : memref<4x8x1xf32, #tpu.memory_space<vmem>>, vector<4x8x1xf32>,
      %cst_15 = arith.constant 0.000000e+00 : f32
      %27 = vector.broadcast %cst_15 : f32 to vector<4x8x8xf32>
      %c0_16 = arith.constant 0 : index
      %c0_17 = arith.constant 0 : index
      %c0_18 = arith.constant 0 : index
      %28 = vector.load %arg15[%c0_16, %c0_17, %c0_18] : memref<4x8x8xf32, #tpu.memory_space<vmem>>, vector<4x8x8xf32>
      tpu.vector_store %arg15[%c0_16, %c0_17, %c0_18], %27 {strides = array<i32>} : memref<4x8x8xf32, #tpu.memory_space<vmem>>, vector<4x8x8xf32>,
      %c0_19 = arith.constant 0 : index
      %c0_20 = arith.constant 0 : index
      %c0_21 = arith.constant 0 : index
      %c0_22 = arith.constant 0 : index
      %29 = vector.load %arg3[%c0_19, %c0_20, %c0_21, %c0_22] : memref<1x4x8x8xbf16, #tpu.memory_space<vmem>>, vector<1x4x8x8xbf16>
      %30 = vector.shape_cast %29 : vector<1x4x8x8xbf16> to vector<4x8x8xbf16>
      %31 = vector.shape_cast %30 : vector<4x8x8xbf16> to vector<32x8xbf16>
      %c0_23 = arith.constant 0 : index
      %c0_24 = arith.constant 0 : index
      %32 = vector.load %arg10[%c0_23, %c0_24] : memref<8x8xbf16, #tpu.memory_space<vmem>>, vector<8x8xbf16>
      %cst_25 = arith.constant dense<0.000000e+00> : vector<32x8xf32>
      %33 = tpu.matmul %31, %32, %cst_25 {dimension_numbers = #tpu.dot_dimension_numbers<[1], [0], [0], [1], [0, 0, 1, 1], [], []>} : vector<32x8xbf16>, vector<8x8xbf16>, vector<32x8xf32> -> vector<32x8xf32>
      %34 = vector.shape_cast %33 : vector<32x8xf32> to vector<4x8x8xf32>
      %35 = arith.extf %30 : vector<4x8x8xbf16> to vector<4x8x8xf32>
      %c0_26 = arith.constant 0 : index
      %c0_27 = arith.constant 0 : index
      %36 = vector.load %arg6[%c0_26, %c0_27] : memref<8x8xf32, #tpu.memory_space<vmem>>, vector<8x8xf32>
      %37 = vector.shape_cast %36 : vector<8x8xf32> to vector<1x8x8xf32>
      %38 = vector.broadcast %37 : vector<1x8x8xf32> to vector<4x8x8xf32>
      %39 = arith.mulf %35, %38 : vector<4x8x8xf32>
      %c0_28 = arith.constant 0 : index
      %c0_29 = arith.constant 0 : index
      %40 = vector.load %arg7[%c0_28, %c0_29] : memref<8x8xf32, #tpu.memory_space<vmem>>, vector<8x8xf32>
      %41 = vector.shape_cast %40 : vector<8x8xf32> to vector<1x8x8xf32>
      %42 = vector.broadcast %41 : vector<1x8x8xf32> to vector<4x8x8xf32>
      %43 = arith.mulf %34, %42 : vector<4x8x8xf32>
      %44 = arith.addf %39, %43 : vector<4x8x8xf32>
      %cst_30 = arith.constant 0.353553385 : f32
      %45 = vector.broadcast %cst_30 : f32 to vector<4x8x8xf32>
      %46 = arith.mulf %44, %45 : vector<4x8x8xf32>
      %47 = arith.truncf %46 : vector<4x8x8xf32> to vector<4x8x8xbf16>
      %c0_31 = arith.constant 0 : index
      %c0_32 = arith.constant 0 : index
      %c0_33 = arith.constant 0 : index
      %48 = vector.load %arg12[%c0_31, %c0_32, %c0_33] : memref<4x8x8xbf16, #tpu.memory_space<vmem>>, vector<4x8x8xbf16>
      tpu.vector_store %arg12[%c0_31, %c0_32, %c0_33], %47 {strides = array<i32>} : memref<4x8x8xbf16, #tpu.memory_space<vmem>>, vector<4x8x8xbf16>,
    } else {
    }
    %c0_i32_2 = arith.constant 0 : i32
    %5 = arith.subi %c0_i32_2, %arg2 : i32
    %c8_i32 = arith.constant 8 : i32
    %6 = arith.muli %5, %c8_i32 : i32
    %c0_i32_3 = arith.constant 0 : i32
    %7 = arith.cmpi sge, %1, %c0_i32_3 : i32
    %c7_i32 = arith.constant 7 : i32
    %8 = arith.cmpi sge, %6, %c7_i32 : i32
    %c8_i32_4 = arith.constant 8 : i32
    %9 = arith.addi %6, %c8_i32_4 : i32
    %c1_i32 = arith.constant 1 : i32
    %10 = arith.subi %9, %c1_i32 : i32
    %c4_i32 = arith.constant 4 : i32
    %11 = arith.cmpi sle, %10, %c4_i32 : i32
    %12 = arith.andi %8, %11 : i1
    %13 = arith.andi %7, %12 : i1
    %14 = arith.extui %13 : i1 to i32
    %c0_i32_5 = arith.constant 0 : i32
    %15 = arith.cmpi ne, %14, %c0_i32_5 : i32
    scf.if %15 {
      %c0 = arith.constant 0 : index
      %c0_9 = arith.constant 0 : index
      %c0_10 = arith.constant 0 : index
      %c0_11 = arith.constant 0 : index
      %23 = vector.load %arg4[%c0, %c0_9, %c0_10, %c0_11] : memref<1x4x8x8xbf16, #tpu.memory_space<vmem>>, vector<1x4x8x8xbf16>
      %24 = vector.shape_cast %23 : vector<1x4x8x8xbf16> to vector<4x8x8xbf16>
      %25 = vector.shape_cast %24 : vector<4x8x8xbf16> to vector<32x8xbf16>
      %c0_12 = arith.constant 0 : index
      %c0_13 = arith.constant 0 : index
      %26 = vector.load %arg10[%c0_12, %c0_13] : memref<8x8xbf16, #tpu.memory_space<vmem>>, vector<8x8xbf16>
      %cst = arith.constant dense<0.000000e+00> : vector<32x8xf32>
      %27 = tpu.matmul %25, %26, %cst {dimension_numbers = #tpu.dot_dimension_numbers<[1], [0], [0], [1], [0, 0, 1, 1], [], []>} : vector<32x8xbf16>, vector<8x8xbf16>, vector<32x8xf32> -> vector<32x8xf32>
      %28 = vector.shape_cast %27 : vector<32x8xf32> to vector<4x8x8xf32>
      %29 = arith.extf %24 : vector<4x8x8xbf16> to vector<4x8x8xf32>
      %c0_14 = arith.constant 0 : index
      %c0_15 = arith.constant 0 : index
      %30 = vector.load %arg8[%c0_14, %c0_15] : memref<8x8xf32, #tpu.memory_space<vmem>>, vector<8x8xf32>
      %31 = vector.shape_cast %30 : vector<8x8xf32> to vector<1x8x8xf32>
      %32 = vector.broadcast %31 : vector<1x8x8xf32> to vector<4x8x8xf32>
      %33 = arith.mulf %29, %32 : vector<4x8x8xf32>
      %c0_16 = arith.constant 0 : index
      %c0_17 = arith.constant 0 : index
      %34 = vector.load %arg9[%c0_16, %c0_17] : memref<8x8xf32, #tpu.memory_space<vmem>>, vector<8x8xf32>
      %35 = vector.shape_cast %34 : vector<8x8xf32> to vector<1x8x8xf32>
      %36 = vector.broadcast %35 : vector<1x8x8xf32> to vector<4x8x8xf32>
      %37 = arith.mulf %28, %36 : vector<4x8x8xf32>
      %38 = arith.addf %33, %37 : vector<4x8x8xf32>
      %39 = arith.truncf %38 : vector<4x8x8xf32> to vector<4x8x8xbf16>
      %c0_18 = arith.constant 0 : index
      %c0_19 = arith.constant 0 : index
      %c0_20 = arith.constant 0 : index
      %c0_21 = arith.constant 0 : index
      %40 = vector.load %arg5[%c0_18, %c0_19, %c0_20, %c0_21] : memref<1x4x8x8xbf16, #tpu.memory_space<vmem>>, vector<1x4x8x8xbf16>
      %41 = vector.shape_cast %40 : vector<1x4x8x8xbf16> to vector<4x8x8xbf16>
      %c0_22 = arith.constant 0 : index
      %c0_23 = arith.constant 0 : index
      %c0_24 = arith.constant 0 : index
      %42 = vector.load %arg12[%c0_22, %c0_23, %c0_24] : memref<4x8x8xbf16, #tpu.memory_space<vmem>>, vector<4x8x8xbf16>
      "tpu.trace_start"() <{level = 10 : i32, message = "hqd,hkd->hqk"}> : () -> ()
      %cst_25 = arith.constant dense<0.000000e+00> : vector<4x8x8xf32>
      %43 = tpu.matmul %42, %39, %cst_25 {dimension_numbers = #tpu.dot_dimension_numbers<[2], [2], [1], [1], [0, 0, 0, 1, 1, 1], [0], [0]>} : vector<4x8x8xbf16>, vector<4x8x8xbf16>, vector<4x8x8xf32> -> vector<4x8x8xf32>
      "tpu.trace_stop"() : () -> ()
      %c0_26 = arith.constant 0 : index
      %c0_27 = arith.constant 0 : index
      %c0_28 = arith.constant 0 : index
      %44 = vector.load %arg13[%c0_26, %c0_27, %c0_28] : memref<4x8x1xf32, #tpu.memory_space<vmem>>, vector<4x8x1xf32>
      %cst_29 = arith.constant dense<0xFF800000> : vector<4x8xf32>
      %45 = vector.multi_reduction <maximumf>, %43, %cst_29 [2] : vector<4x8x8xf32> to vector<4x8xf32>
      %46 = vector.shape_cast %45 : vector<4x8xf32> to vector<4x8x1xf32>
      %47 = arith.maximumf %44, %46 : vector<4x8x1xf32>
      %48 = arith.subf %44, %47 : vector<4x8x1xf32>
      %49 = math.exp %48 : vector<4x8x1xf32>
      %50 = vector.broadcast %47 : vector<4x8x1xf32> to vector<4x8x8xf32>
      %51 = arith.subf %43, %50 : vector<4x8x8xf32>
      %52 = math.exp %51 : vector<4x8x8xf32>
      %c0_30 = arith.constant 0 : index
      %c0_31 = arith.constant 0 : index
      %c0_32 = arith.constant 0 : index
      %53 = vector.load %arg14[%c0_30, %c0_31, %c0_32] : memref<4x8x1xf32, #tpu.memory_space<vmem>>, vector<4x8x1xf32>
      %54 = arith.mulf %49, %53 : vector<4x8x1xf32>
      %cst_33 = arith.constant dense<0.000000e+00> : vector<4x8xf32>
      %55 = vector.multi_reduction <add>, %52, %cst_33 [2] : vector<4x8x8xf32> to vector<4x8xf32>
      %56 = vector.shape_cast %55 : vector<4x8xf32> to vector<4x8x1xf32>
      %57 = arith.addf %54, %56 : vector<4x8x1xf32>
      %c0_34 = arith.constant 0 : index
      %c0_35 = arith.constant 0 : index
      %c0_36 = arith.constant 0 : index
      %58 = vector.load %arg14[%c0_34, %c0_35, %c0_36] : memref<4x8x1xf32, #tpu.memory_space<vmem>>, vector<4x8x1xf32>
      tpu.vector_store %arg14[%c0_34, %c0_35, %c0_36], %57 {strides = array<i32>} : memref<4x8x1xf32, #tpu.memory_space<vmem>>, vector<4x8x1xf32>,
      %c0_37 = arith.constant 0 : index
      %c0_38 = arith.constant 0 : index
      %c0_39 = arith.constant 0 : index
      %59 = vector.load %arg15[%c0_37, %c0_38, %c0_39] : memref<4x8x8xf32, #tpu.memory_space<vmem>>, vector<4x8x8xf32>
      %60 = vector.broadcast %49 : vector<4x8x1xf32> to vector<4x8x8xf32>
      %61 = arith.mulf %60, %59 : vector<4x8x8xf32>
      %62 = arith.truncf %52 : vector<4x8x8xf32> to vector<4x8x8xbf16>
      "tpu.trace_start"() <{level = 10 : i32, message = "hqk,hkd->hqd"}> : () -> ()
      %cst_40 = arith.constant dense<0.000000e+00> : vector<4x8x8xf32>
      %63 = tpu.matmul %62, %41, %cst_40 {dimension_numbers = #tpu.dot_dimension_numbers<[2], [1], [1], [2], [0, 0, 0, 1, 1, 2], [0], [0]>} : vector<4x8x8xbf16>, vector<4x8x8xbf16>, vector<4x8x8xf32> -> vector<4x8x8xf32>
      "tpu.trace_stop"() : () -> ()
      %64 = arith.addf %61, %63 : vector<4x8x8xf32>
      %c0_41 = arith.constant 0 : index
      %c0_42 = arith.constant 0 : index
      %c0_43 = arith.constant 0 : index
      %65 = vector.load %arg15[%c0_41, %c0_42, %c0_43] : memref<4x8x8xf32, #tpu.memory_space<vmem>>, vector<4x8x8xf32>
      tpu.vector_store %arg15[%c0_41, %c0_42, %c0_43], %64 {strides = array<i32>} : memref<4x8x8xf32, #tpu.memory_space<vmem>>, vector<4x8x8xf32>,
      %c0_44 = arith.constant 0 : index
      %c0_45 = arith.constant 0 : index
      %c0_46 = arith.constant 0 : index
      %66 = vector.load %arg13[%c0_44, %c0_45, %c0_46] : memref<4x8x1xf32, #tpu.memory_space<vmem>>, vector<4x8x1xf32>
      tpu.vector_store %arg13[%c0_44, %c0_45, %c0_46], %47 {strides = array<i32>} : memref<4x8x1xf32, #tpu.memory_space<vmem>>, vector<4x8x1xf32>,
    } else {
    }
    %true = arith.constant true
    %16 = arith.xori %12, %true : i1
    %17 = arith.andi %7, %16 : i1
    %18 = arith.extui %17 : i1 to i32
    %c0_i32_6 = arith.constant 0 : i32
    %19 = arith.cmpi ne, %18, %c0_i32_6 : i32
    scf.if %19 {
      %c0 = arith.constant 0 : index
      %c0_9 = arith.constant 0 : index
      %c0_10 = arith.constant 0 : index
      %c0_11 = arith.constant 0 : index
      %23 = vector.load %arg4[%c0, %c0_9, %c0_10, %c0_11] : memref<1x4x8x8xbf16, #tpu.memory_space<vmem>>, vector<1x4x8x8xbf16>
      %24 = vector.shape_cast %23 : vector<1x4x8x8xbf16> to vector<4x8x8xbf16>
      %25 = vector.shape_cast %24 : vector<4x8x8xbf16> to vector<32x8xbf16>
      %c0_12 = arith.constant 0 : index
      %c0_13 = arith.constant 0 : index
      %26 = vector.load %arg10[%c0_12, %c0_13] : memref<8x8xbf16, #tpu.memory_space<vmem>>, vector<8x8xbf16>
      %cst = arith.constant dense<0.000000e+00> : vector<32x8xf32>
      %27 = tpu.matmul %25, %26, %cst {dimension_numbers = #tpu.dot_dimension_numbers<[1], [0], [0], [1], [0, 0, 1, 1], [], []>} : vector<32x8xbf16>, vector<8x8xbf16>, vector<32x8xf32> -> vector<32x8xf32>
      %28 = vector.shape_cast %27 : vector<32x8xf32> to vector<4x8x8xf32>
      %29 = arith.extf %24 : vector<4x8x8xbf16> to vector<4x8x8xf32>
      %c0_14 = arith.constant 0 : index
      %c0_15 = arith.constant 0 : index
      %30 = vector.load %arg8[%c0_14, %c0_15] : memref<8x8xf32, #tpu.memory_space<vmem>>, vector<8x8xf32>
      %31 = vector.shape_cast %30 : vector<8x8xf32> to vector<1x8x8xf32>
      %32 = vector.broadcast %31 : vector<1x8x8xf32> to vector<4x8x8xf32>
      %33 = arith.mulf %29, %32 : vector<4x8x8xf32>
      %c0_16 = arith.constant 0 : index
      %c0_17 = arith.constant 0 : index
      %34 = vector.load %arg9[%c0_16, %c0_17] : memref<8x8xf32, #tpu.memory_space<vmem>>, vector<8x8xf32>
      %35 = vector.shape_cast %34 : vector<8x8xf32> to vector<1x8x8xf32>
      %36 = vector.broadcast %35 : vector<1x8x8xf32> to vector<4x8x8xf32>
      %37 = arith.mulf %28, %36 : vector<4x8x8xf32>
      %38 = arith.addf %33, %37 : vector<4x8x8xf32>
      %39 = arith.truncf %38 : vector<4x8x8xf32> to vector<4x8x8xbf16>
      %c0_18 = arith.constant 0 : index
      %c0_19 = arith.constant 0 : index
      %c0_20 = arith.constant 0 : index
      %c0_21 = arith.constant 0 : index
      %40 = vector.load %arg5[%c0_18, %c0_19, %c0_20, %c0_21] : memref<1x4x8x8xbf16, #tpu.memory_space<vmem>>, vector<1x4x8x8xbf16>
      %41 = vector.shape_cast %40 : vector<1x4x8x8xbf16> to vector<4x8x8xbf16>
      %c0_22 = arith.constant 0 : index
      %c0_23 = arith.constant 0 : index
      %c0_24 = arith.constant 0 : index
      %42 = vector.load %arg12[%c0_22, %c0_23, %c0_24] : memref<4x8x8xbf16, #tpu.memory_space<vmem>>, vector<4x8x8xbf16>
      "tpu.trace_start"() <{level = 10 : i32, message = "hqd,hkd->hqk"}> : () -> ()
      %cst_25 = arith.constant dense<0.000000e+00> : vector<4x8x8xf32>
      %43 = tpu.matmul %42, %39, %cst_25 {dimension_numbers = #tpu.dot_dimension_numbers<[2], [2], [1], [1], [0, 0, 0, 1, 1, 1], [0], [0]>} : vector<4x8x8xbf16>, vector<4x8x8xbf16>, vector<4x8x8xf32> -> vector<4x8x8xf32>
      "tpu.trace_stop"() : () -> ()
      %44 = tpu.iota {dimensions = array<i32: 0>} : vector<8x8xi32>
      %45 = tpu.iota {dimensions = array<i32: 1>} : vector<8x8xi32>
      %46 = arith.subi %44, %45 : vector<8x8xi32>
      %47 = vector.broadcast %6 : i32 to vector<8x8xi32>
      %48 = arith.addi %46, %47 : vector<8x8xi32>
      %c0_i32_26 = arith.constant 0 : i32
      %49 = vector.broadcast %c0_i32_26 : i32 to vector<8x8xi32>
      %50 = arith.cmpi sge, %48, %49 : vector<8x8xi32>
      %c4_i32_27 = arith.constant 4 : i32
      %51 = vector.broadcast %c4_i32_27 : i32 to vector<8x8xi32>
      %52 = arith.cmpi sle, %48, %51 : vector<8x8xi32>
      %53 = arith.andi %50, %52 : vector<8x8xi1>
      %54 = vector.shape_cast %53 : vector<8x8xi1> to vector<1x8x8xi1>
      %cst_28 = arith.constant 0xFF800000 : f32
      %55 = vector.shape_cast %54 : vector<1x8x8xi1> to vector<1x8x8xi1>
      %56 = vector.broadcast %55 : vector<1x8x8xi1> to vector<4x8x8xi1>
      %57 = vector.broadcast %cst_28 : f32 to vector<4x8x8xf32>
      %58 = arith.select %56, %43, %57 : vector<4x8x8xi1>, vector<4x8x8xf32>
      %c0_29 = arith.constant 0 : index
      %c0_30 = arith.constant 0 : index
      %c0_31 = arith.constant 0 : index
      %59 = vector.load %arg13[%c0_29, %c0_30, %c0_31] : memref<4x8x1xf32, #tpu.memory_space<vmem>>, vector<4x8x1xf32>
      %cst_32 = arith.constant dense<0xFF800000> : vector<4x8xf32>
      %60 = vector.multi_reduction <maximumf>, %58, %cst_32 [2] : vector<4x8x8xf32> to vector<4x8xf32>
      %61 = vector.shape_cast %60 : vector<4x8xf32> to vector<4x8x1xf32>
      %62 = arith.maximumf %59, %61 : vector<4x8x1xf32>
      %63 = arith.subf %59, %62 : vector<4x8x1xf32>
      %64 = math.exp %63 : vector<4x8x1xf32>
      %65 = vector.broadcast %62 : vector<4x8x1xf32> to vector<4x8x8xf32>
      %66 = arith.subf %58, %65 : vector<4x8x8xf32>
      %67 = math.exp %66 : vector<4x8x8xf32>
      %c0_33 = arith.constant 0 : index
      %c0_34 = arith.constant 0 : index
      %c0_35 = arith.constant 0 : index
      %68 = vector.load %arg14[%c0_33, %c0_34, %c0_35] : memref<4x8x1xf32, #tpu.memory_space<vmem>>, vector<4x8x1xf32>
      %69 = arith.mulf %64, %68 : vector<4x8x1xf32>
      %cst_36 = arith.constant dense<0.000000e+00> : vector<4x8xf32>
      %70 = vector.multi_reduction <add>, %67, %cst_36 [2] : vector<4x8x8xf32> to vector<4x8xf32>
      %71 = vector.shape_cast %70 : vector<4x8xf32> to vector<4x8x1xf32>
      %72 = arith.addf %69, %71 : vector<4x8x1xf32>
      %c0_37 = arith.constant 0 : index
      %c0_38 = arith.constant 0 : index
      %c0_39 = arith.constant 0 : index
      %73 = vector.load %arg14[%c0_37, %c0_38, %c0_39] : memref<4x8x1xf32, #tpu.memory_space<vmem>>, vector<4x8x1xf32>
      tpu.vector_store %arg14[%c0_37, %c0_38, %c0_39], %72 {strides = array<i32>} : memref<4x8x1xf32, #tpu.memory_space<vmem>>, vector<4x8x1xf32>,
      %c0_40 = arith.constant 0 : index
      %c0_41 = arith.constant 0 : index
      %c0_42 = arith.constant 0 : index
      %74 = vector.load %arg15[%c0_40, %c0_41, %c0_42] : memref<4x8x8xf32, #tpu.memory_space<vmem>>, vector<4x8x8xf32>
      %75 = vector.broadcast %64 : vector<4x8x1xf32> to vector<4x8x8xf32>
      %76 = arith.mulf %75, %74 : vector<4x8x8xf32>
      %77 = arith.truncf %67 : vector<4x8x8xf32> to vector<4x8x8xbf16>
      "tpu.trace_start"() <{level = 10 : i32, message = "hqk,hkd->hqd"}> : () -> ()
      %cst_43 = arith.constant dense<0.000000e+00> : vector<4x8x8xf32>
      %78 = tpu.matmul %77, %41, %cst_43 {dimension_numbers = #tpu.dot_dimension_numbers<[2], [1], [1], [2], [0, 0, 0, 1, 1, 2], [0], [0]>} : vector<4x8x8xbf16>, vector<4x8x8xbf16>, vector<4x8x8xf32> -> vector<4x8x8xf32>
      "tpu.trace_stop"() : () -> ()
      %79 = arith.addf %76, %78 : vector<4x8x8xf32>
      %c0_44 = arith.constant 0 : index
      %c0_45 = arith.constant 0 : index
      %c0_46 = arith.constant 0 : index
      %80 = vector.load %arg15[%c0_44, %c0_45, %c0_46] : memref<4x8x8xf32, #tpu.memory_space<vmem>>, vector<4x8x8xf32>
      tpu.vector_store %arg15[%c0_44, %c0_45, %c0_46], %79 {strides = array<i32>} : memref<4x8x8xf32, #tpu.memory_space<vmem>>, vector<4x8x8xf32>,
      %c0_47 = arith.constant 0 : index
      %c0_48 = arith.constant 0 : index
      %c0_49 = arith.constant 0 : index
      %81 = vector.load %arg13[%c0_47, %c0_48, %c0_49] : memref<4x8x1xf32, #tpu.memory_space<vmem>>, vector<4x8x1xf32>
      tpu.vector_store %arg13[%c0_47, %c0_48, %c0_49], %62 {strides = array<i32>} : memref<4x8x1xf32, #tpu.memory_space<vmem>>, vector<4x8x1xf32>,
    } else {
    }
    %c0_i32_7 = arith.constant 0 : i32
    %20 = arith.cmpi eq, %arg2, %c0_i32_7 : i32
    %21 = arith.extui %20 : i1 to i32
    %c0_i32_8 = arith.constant 0 : i32
    %22 = arith.cmpi ne, %21, %c0_i32_8 : i32
    scf.if %22 {
      %c0 = arith.constant 0 : index
      %c0_9 = arith.constant 0 : index
      %c0_10 = arith.constant 0 : index
      %23 = vector.load %arg15[%c0, %c0_9, %c0_10] : memref<4x8x8xf32, #tpu.memory_space<vmem>>, vector<4x8x8xf32>
      %c0_11 = arith.constant 0 : index
      %c0_12 = arith.constant 0 : index
      %c0_13 = arith.constant 0 : index
      %24 = vector.load %arg14[%c0_11, %c0_12, %c0_13] : memref<4x8x1xf32, #tpu.memory_space<vmem>>, vector<4x8x1xf32>
      %25 = tpu.reciprocal %24 {approx = true} : vector<4x8x1xf32> -> vector<4x8x1xf32>
      %26 = vector.broadcast %25 : vector<4x8x1xf32> to vector<4x8x8xf32>
      %27 = arith.mulf %23, %26 : vector<4x8x8xf32>
      %28 = arith.truncf %27 : vector<4x8x8xf32> to vector<4x8x8xbf16>
      %c0_14 = arith.constant 0 : index
      %c0_15 = arith.constant 0 : index
      %c0_16 = arith.constant 0 : index
      %c0_17 = arith.constant 0 : index
      %29 = vector.load %arg11[%c0_14, %c0_15, %c0_16, %c0_17] : memref<1x4x8x8xbf16, #tpu.memory_space<vmem>>, vector<1x4x8x8xbf16>
      %30 = vector.shape_cast %29 : vector<1x4x8x8xbf16> to vector<4x8x8xbf16>
      %31 = vector.shape_cast %28 : vector<4x8x8xbf16> to vector<1x4x8x8xbf16>
      tpu.vector_store %arg11[%c0_14, %c0_15, %c0_16, %c0_17], %31 {strides = array<i32>} : memref<1x4x8x8xbf16, #tpu.memory_space<vmem>>, vector<1x4x8x8xbf16>,
    } else {
    }
    return
  }
  func.func @transform_0(%arg0: i32, %arg1: i32, %arg2: i32) -> (i32, i32, i32, i32) {
    %c0_i32 = arith.constant 0 : i32
    %c0_i32_0 = arith.constant 0 : i32
    %c0_i32_1 = arith.constant 0 : i32
    return %arg0, %c0_i32, %arg1, %c0_i32_0 : i32, i32, i32, i32
  }
  func.func @transform_1(%arg0: i32, %arg1: i32, %arg2: i32) -> (i32, i32, i32, i32) {
    %c0_i32 = arith.constant 0 : i32
    %0 = arith.subi %arg1, %c0_i32 : i32
    %1 = arith.addi %0, %arg2 : i32
    %c0_i32_0 = arith.constant 0 : i32
    %2 = arith.maxsi %1, %c0_i32_0 : i32
    %c0_i32_1 = arith.constant 0 : i32
    %c0_i32_2 = arith.constant 0 : i32
    %c0_i32_3 = arith.constant 0 : i32
    return %arg0, %c0_i32_1, %2, %c0_i32_2 : i32, i32, i32, i32
  }
  func.func @transform_2(%arg0: i32, %arg1: i32, %arg2: i32) -> (i32, i32, i32, i32) {
    %c0_i32 = arith.constant 0 : i32
    %0 = arith.subi %arg1, %c0_i32 : i32
    %1 = arith.addi %0, %arg2 : i32
    %c0_i32_0 = arith.constant 0 : i32
    %2 = arith.maxsi %1, %c0_i32_0 : i32
    %c0_i32_1 = arith.constant 0 : i32
    %c0_i32_2 = arith.constant 0 : i32
    %c0_i32_3 = arith.constant 0 : i32
    return %arg0, %c0_i32_1, %2, %c0_i32_2 : i32, i32, i32, i32
  }
  func.func @transform_3(%arg0: i32, %arg1: i32, %arg2: i32) -> (i32, i32) {
    %c0_i32 = arith.constant 0 : i32
    %c0_i32_0 = arith.constant 0 : i32
    return %arg1, %c0_i32 : i32, i32
  }
  func.func @transform_4(%arg0: i32, %arg1: i32, %arg2: i32) -> (i32, i32) {
    %c0_i32 = arith.constant 0 : i32
    %c0_i32_0 = arith.constant 0 : i32
    return %arg1, %c0_i32 : i32, i32
  }
  func.func @transform_5(%arg0: i32, %arg1: i32, %arg2: i32) -> (i32, i32) {
    %c0_i32 = arith.constant 0 : i32
    %0 = arith.subi %arg1, %c0_i32 : i32
    %1 = arith.addi %0, %arg2 : i32
    %c0_i32_0 = arith.constant 0 : i32
    %2 = arith.maxsi %1, %c0_i32_0 : i32
    %c0_i32_1 = arith.constant 0 : i32
    %c0_i32_2 = arith.constant 0 : i32
    return %2, %c0_i32_1 : i32, i32
  }
  func.func @transform_6(%arg0: i32, %arg1: i32, %arg2: i32) -> (i32, i32) {
    %c0_i32 = arith.constant 0 : i32
    %0 = arith.subi %arg1, %c0_i32 : i32
    %1 = arith.addi %0, %arg2 : i32
    %c0_i32_0 = arith.constant 0 : i32
    %2 = arith.maxsi %1, %c0_i32_0 : i32
    %c0_i32_1 = arith.constant 0 : i32
    %c0_i32_2 = arith.constant 0 : i32
    return %2, %c0_i32_1 : i32, i32
  }
  func.func @transform_7(%arg0: i32, %arg1: i32, %arg2: i32) -> (i32, i32) {
    %c0_i32 = arith.constant 0 : i32
    %c0_i32_0 = arith.constant 0 : i32
    %c0_i32_1 = arith.constant 0 : i32
    return %c0_i32, %c0_i32_0 : i32, i32
  }
  func.func @transform_8(%arg0: i32, %arg1: i32, %arg2: i32) -> (i32, i32, i32, i32) {
    %c0_i32 = arith.constant 0 : i32
    %c0_i32_0 = arith.constant 0 : i32
    %c0_i32_1 = arith.constant 0 : i32
    return %arg0, %c0_i32, %arg1, %c0_i32_0 : i32, i32, i32, i32
  }
}

</mosaic_0001>

<llo_original>
// kernel: tpu_custom_call.1
$region0: #{tpu_custom_call.1}
  #allocation0 [shape = 'u32[]', space=smem, size = 0x4, offset = 0x4, fixed_abs, tag = 'smem constant byte address 0x4 - core index']
  #allocation1 [shape = 'u32[144,128]{1,0:T(1,128)}', space=vmem, size = 0x12000, scoped, tag = 'internal scratch']
  #allocation2 [shape = 'bf16[4,8,8]{2,1,0:T(8,128)(2,1)}', space=vmem, size = 0x2000, scoped, tag = 'scratch operand']
  #allocation3 [shape = 'f32[4,8,1]{2,1,0:T(8,128)}', space=vmem, size = 0x4000, scoped, tag = 'scratch operand']
  #allocation4 [shape = 'f32[4,8,1]{2,1,0:T(8,128)}', space=vmem, size = 0x4000, scoped, tag = 'scratch operand']
  #allocation5 [shape = 'f32[4,8,8]{2,1,0:T(8,128)}', space=vmem, size = 0x4000, scoped, tag = 'scratch operand']
  %s0 = inlined_call_operand.hbm [shape: bf16[2,4,8,8], index: 0, kind: input, shape index: {}]
  %s1 = inlined_call_operand.hbm [shape: bf16[2,4,8,8], index: 1, kind: input, shape index: {}]
  %s2 = inlined_call_operand.hbm [shape: bf16[2,4,8,8], index: 2, kind: input, shape index: {}]
  %s3 = inlined_call_operand.vmem [shape: f32[8,8], index: 3, kind: input, shape index: {}]
  %s4 = inlined_call_operand.hbm [shape: f32[8,8], index: 4, kind: input, shape index: {}]
  %s5 = inlined_call_operand.vmem [shape: f32[8,8], index: 5, kind: input, shape index: {}]
  %s6 = inlined_call_operand.hbm [shape: f32[8,8], index: 6, kind: input, shape index: {}]
  %s7 = inlined_call_operand.vmem [shape: bf16[8,8], index: 7, kind: input, shape index: {}]
  %s8 = inlined_call_operand.hbm [shape: bf16[2,4,8,8], index: 8, kind: output, shape index: {}]
  %s9 = sld [smem:[#allocation0]]
  $region101: #{tpu_custom_call.1} parent=0
    _
  %s11 = ssub.s32 1, %s9
  %s12 = scalar_select 0, %s11, %s9
  $region1: #{tpu_custom_call.1} parent=0
    #allocation6 [shape = 'u8[16384]{0}', space=vmem, size = 0x4000, scoped, tag = 'input window, operand 0']
    #allocation7 [shape = 's32[2]{0}', space=sflag, size = 0x8, scoped, tag = 'scoped memory for tpu_custom_call.1']
    #allocation8 [shape = 's32[2]{0}', space=sflag, size = 0x8, scoped, tag = 'scoped memory for tpu_custom_call.1']
    #allocation9 [shape = 'u8[16384]{0}', space=vmem, size = 0x4000, scoped, tag = 'input window, operand 1']
    #allocation10 [shape = 's32[2]{0}', space=sflag, size = 0x8, scoped, tag = 'scoped memory for tpu_custom_call.1']
    #allocation11 [shape = 'u8[16384]{0}', space=vmem, size = 0x4000, scoped, tag = 'input window, operand 2']
    #allocation12 [shape = 'u8[4096]{0}', space=vmem, size = 0x1000, scoped, tag = 'input window, operand 4, single buffered']
    #allocation13 [shape = 's32[1]{0}', space=sflag, size = 0x4, scoped, tag = 'scoped memory for tpu_custom_call.1']
    #allocation14 [shape = 'u8[4096]{0}', space=vmem, size = 0x1000, scoped, tag = 'input window, operand 6, single buffered']
    #allocation15 [shape = 'u8[16384]{0}', space=vmem, size = 0x4000, scoped, tag = 'output window, operand 0']
    %13 = vsyncpa [#allocation7], 0
    %s14 = scalar_lea.sflag [#allocation7], 1
    %15 = vsyncpa %s14, 0
    %16 = vsyncpa [#allocation10], 0
    %s17 = scalar_lea.sflag [#allocation10], 1
    %18 = vsyncpa %s17, 0
    %19 = vsyncpa [#allocation13], 0
    %20 = vsyncpa [#allocation8], 0
    %s21 = scalar_lea.sflag [#allocation8], 1
    %22 = vsyncpa %s21, 0
    loop: start=0, step=1, limit=4
    $region2: #{tpu_custom_call.1} parent=1 // loop_pre_header
      _
    $region3: #{tpu_custom_call.1} parent=1 // loop_header
      %s24 = sphi 0, %s28
      %p25 = scmp.ge.s32.totalorder %s24, 4
      %s31 = sphi 0, %s50
      %s32 = sphi 0, %s46
      %s33 = sphi 0, %s42
      %s34 = sphi 0, %s31
      %s35 = sphi 0, %s32
      %s36 = sphi 0, %s33
      %s37 = sphi 0, %s34
      %s38 = sphi 0, %s35
      %s39 = sphi 0, %s36
      %s55 = sphi 0, %s57
      %s58 = sphi 0, %s55
      %s59 = sphi 0, %s58
      %s75 = sphi 0, %s59
      %s89 = sphi 0, %s91
      %s92 = sphi 0, %s89
      %s93 = sphi 0, %s92
      %s109 = sphi 0, %s93
      %s123 = sphi 0, %s125
      %s126 = sphi 0, %s123
      %s127 = sphi 0, %s126
      %s143 = sphi 0, %s127
      %s149 = sphi 0, %s151
      %s152 = sphi 0, %s149
      %s153 = sphi 0, %s152
      %s169 = sphi 0, %s153
      %s175 = sphi 0, %s177
      %s178 = sphi 0, %s175
      %s179 = sphi 0, %s178
      %s195 = sphi 0, %s179
      %s207 = sphi 0, %s209
      %s210 = sphi 0, %s207
      %s211 = sphi 0, %s210
      %s227 = sphi 0, %s211
      %s239 = sphi 0, %s241
      %s242 = sphi 0, %s239
      %s243 = sphi 0, %s242
      %s259 = sphi 0, %s243
      %s263 = sphi 0, %s263
      %s265 = sphi 0, %s263
      %s266 = sphi 0, %s265
      %s280 = sphi 0, %s266
      %s288 = sphi 0, %s290
      %s291 = sphi 0, %s288
      %s292 = sphi 0, %s291
      %s308 = sphi 0, %s292
    $region4: #{tpu_custom_call.1} parent=1 // loop_header_branch
      %27 = sbr.rel (%p25) target = $region8
    $region5: #{tpu_custom_call.1} parent=1 // loop_body
      %s29 = ssub.s32 %s24, 1
      %s30 = ssub.s32 %s24, 2
      %s40 = sadd.s32 1, %s33
      %p41 = scmp.ge.s32.totalorder %s40, 1
      %s42 = scalar_select %p41, 0, %s40
      %s43 = sadd.s32 1, %s32
      %s44 = scalar_select %p41, %s43, %s32
      %p45 = scmp.ge.s32.totalorder %s44, 1
      %s46 = scalar_select %p45, 0, %s44
      %s47 = sadd.s32 1, %s31
      %s48 = scalar_select %p45, %s47, %s31
      %p49 = scmp.ge.s32.totalorder %s48, 2
      %s50 = scalar_select %p49, 0, %s48
      %s51 = ssub.s32 %s31, %s50
      %s52 = ssub.s32 %s32, %s46
      %s53 = sor.u32 %s51, %s52
      %p54 = scmp.eq.s32.totalorder %s53, 0
      %s56 = sadd.s32 %s55, 1
      %s57 = scalar_select %p54, %s55, %s56
      %p60 = pneg %p54
      %p61 = scmp.eq.s32.totalorder %s24, 1
      %p62 = por %p60, %p61
      %p63 = scmp.ne.s32.totalorder %s55, %s58
      %p64 = scmp.eq.s32.totalorder %s24, 0
      %p65 = por %p63, %p64
      %p66 = scmp.ne.s32.totalorder %s55, %s58
      %p67 = scmp.eq.s32.totalorder %s29, 1
      %p68 = por %p66, %p67
      %p69 = scmp.ne.s32.totalorder %s58, %s59
      %p70 = scmp.eq.s32.totalorder %s29, 0
      %p71 = por %p69, %p70
      %p72 = scmp.ne.s32.totalorder %s58, %s59
      %p73 = scmp.eq.s32.totalorder %s30, 1
      %p74 = por %p72, %p73
      %p76 = scmp.ne.s32.totalorder %s59, %s75
      %p77 = scmp.eq.s32.totalorder %s30, 0
      %p78 = por %p76, %p77
      %s79 = sadd.s32 %s32, %s33
      %p80 = scmp.gt.s32.totalorder %s79, 0
      %s81 = scalar_select %p80, %s79, 0
      %s82 = sadd.s32 %s46, %s42
      %p83 = scmp.gt.s32.totalorder %s82, 0
      %s84 = scalar_select %p83, %s82, 0
      %s85 = ssub.s32 %s31, %s50
      %s86 = ssub.s32 %s81, %s84
      %s87 = sor.u32 %s85, %s86
      %p88 = scmp.eq.s32.totalorder %s87, 0
      %s90 = sadd.s32 %s89, 1
      %s91 = scalar_select %p88, %s89, %s90
      %p94 = pneg %p88
      %p95 = scmp.eq.s32.totalorder %s24, 1
      %p96 = por %p94, %p95
      %p97 = scmp.ne.s32.totalorder %s89, %s92
      %p98 = scmp.eq.s32.totalorder %s24, 0
      %p99 = por %p97, %p98
      %p100 = scmp.ne.s32.totalorder %s89, %s92
      %p101 = scmp.eq.s32.totalorder %s29, 1
      %p102 = por %p100, %p101
      %p103 = scmp.ne.s32.totalorder %s92, %s93
      %p104 = scmp.eq.s32.totalorder %s29, 0
      %p105 = por %p103, %p104
      %p106 = scmp.ne.s32.totalorder %s92, %s93
      %p107 = scmp.eq.s32.totalorder %s30, 1
      %p108 = por %p106, %p107
      %p110 = scmp.ne.s32.totalorder %s93, %s109
      %p111 = scmp.eq.s32.totalorder %s30, 0
      %p112 = por %p110, %p111
      %s113 = sadd.s32 %s32, %s33
      %p114 = scmp.gt.s32.totalorder %s113, 0
      %s115 = scalar_select %p114, %s113, 0
      %s116 = sadd.s32 %s46, %s42
      %p117 = scmp.gt.s32.totalorder %s116, 0
      %s118 = scalar_select %p117, %s116, 0
      %s119 = ssub.s32 %s31, %s50
      %s120 = ssub.s32 %s115, %s118
      %s121 = sor.u32 %s119, %s120
      %p122 = scmp.eq.s32.totalorder %s121, 0
      %s124 = sadd.s32 %s123, 1
      %s125 = scalar_select %p122, %s123, %s124
      %p128 = pneg %p122
      %p129 = scmp.eq.s32.totalorder %s24, 1
      %p130 = por %p128, %p129
      %p131 = scmp.ne.s32.totalorder %s123, %s126
      %p132 = scmp.eq.s32.totalorder %s24, 0
      %p133 = por %p131, %p132
      %p134 = scmp.ne.s32.totalorder %s123, %s126
      %p135 = scmp.eq.s32.totalorder %s29, 1
      %p136 = por %p134, %p135
      %p137 = scmp.ne.s32.totalorder %s126, %s127
      %p138 = scmp.eq.s32.totalorder %s29, 0
      %p139 = por %p137, %p138
      %p140 = scmp.ne.s32.totalorder %s126, %s127
      %p141 = scmp.eq.s32.totalorder %s30, 1
      %p142 = por %p140, %p141
      %p144 = scmp.ne.s32.totalorder %s127, %s143
      %p145 = scmp.eq.s32.totalorder %s30, 0
      %p146 = por %p144, %p145
      %s147 = ssub.s32 %s32, %s46
      %p148 = scmp.eq.s32.totalorder %s147, 0
      %s150 = sadd.s32 %s149, 1
      %s151 = scalar_select %p148, %s149, %s150
      %p154 = pneg %p148
      %p155 = scmp.eq.s32.totalorder %s24, 1
      %p156 = por %p154, %p155
      %p157 = scmp.ne.s32.totalorder %s149, %s152
      %p158 = scmp.eq.s32.totalorder %s24, 0
      %p159 = por %p157, %p158
      %p160 = scmp.ne.s32.totalorder %s149, %s152
      %p161 = scmp.eq.s32.totalorder %s29, 1
      %p162 = por %p160, %p161
      %p163 = scmp.ne.s32.totalorder %s152, %s153
      %p164 = scmp.eq.s32.totalorder %s29, 0
      %p165 = por %p163, %p164
      %p166 = scmp.ne.s32.totalorder %s152, %s153
      %p167 = scmp.eq.s32.totalorder %s30, 1
      %p168 = por %p166, %p167
      %p170 = scmp.ne.s32.totalorder %s153, %s169
      %p171 = scmp.eq.s32.totalorder %s30, 0
      %p172 = por %p170, %p171
      %s173 = ssub.s32 %s32, %s46
      %p174 = scmp.eq.s32.totalorder %s173, 0
      %s176 = sadd.s32 %s175, 1
      %s177 = scalar_select %p174, %s175, %s176
      %p180 = pneg %p174
      %p181 = scmp.eq.s32.totalorder %s24, 1
      %p182 = por %p180, %p181
      %p183 = scmp.ne.s32.totalorder %s175, %s178
      %p184 = scmp.eq.s32.totalorder %s24, 0
      %p185 = por %p183, %p184
      %p186 = scmp.ne.s32.totalorder %s175, %s178
      %p187 = scmp.eq.s32.totalorder %s29, 1
      %p188 = por %p186, %p187
      %p189 = scmp.ne.s32.totalorder %s178, %s179
      %p190 = scmp.eq.s32.totalorder %s29, 0
      %p191 = por %p189, %p190
      %p192 = scmp.ne.s32.totalorder %s178, %s179
      %p193 = scmp.eq.s32.totalorder %s30, 1
      %p194 = por %p192, %p193
      %p196 = scmp.ne.s32.totalorder %s179, %s195
      %p197 = scmp.eq.s32.totalorder %s30, 0
      %p198 = por %p196, %p197
      %s199 = sadd.s32 %s32, %s33
      %p200 = scmp.gt.s32.totalorder %s199, 0
      %s201 = scalar_select %p200, %s199, 0
      %s202 = sadd.s32 %s46, %s42
      %p203 = scmp.gt.s32.totalorder %s202, 0
      %s204 = scalar_select %p203, %s202, 0
      %s205 = ssub.s32 %s201, %s204
      %p206 = scmp.eq.s32.totalorder %s205, 0
      %s208 = sadd.s32 %s207, 1
      %s209 = scalar_select %p206, %s207, %s208
      %p212 = pneg %p206
      %p213 = scmp.eq.s32.totalorder %s24, 1
      %p214 = por %p212, %p213
      %p215 = scmp.ne.s32.totalorder %s207, %s210
      %p216 = scmp.eq.s32.totalorder %s24, 0
      %p217 = por %p215, %p216
      %p218 = scmp.ne.s32.totalorder %s207, %s210
      %p219 = scmp.eq.s32.totalorder %s29, 1
      %p220 = por %p218, %p219
      %p221 = scmp.ne.s32.totalorder %s210, %s211
      %p222 = scmp.eq.s32.totalorder %s29, 0
      %p223 = por %p221, %p222
      %p224 = scmp.ne.s32.totalorder %s210, %s211
      %p225 = scmp.eq.s32.totalorder %s30, 1
      %p226 = por %p224, %p225
      %p228 = scmp.ne.s32.totalorder %s211, %s227
      %p229 = scmp.eq.s32.totalorder %s30, 0
      %p230 = por %p228, %p229
      %s231 = sadd.s32 %s32, %s33
      %p232 = scmp.gt.s32.totalorder %s231, 0
      %s233 = scalar_select %p232, %s231, 0
      %s234 = sadd.s32 %s46, %s42
      %p235 = scmp.gt.s32.totalorder %s234, 0
      %s236 = scalar_select %p235, %s234, 0
      %s237 = ssub.s32 %s233, %s236
      %p238 = scmp.eq.s32.totalorder %s237, 0
      %s240 = sadd.s32 %s239, 1
      %s241 = scalar_select %p238, %s239, %s240
      %p244 = pneg %p238
      %p245 = scmp.eq.s32.totalorder %s24, 1
      %p246 = por %p244, %p245
      %p247 = scmp.ne.s32.totalorder %s239, %s242
      %p248 = scmp.eq.s32.totalorder %s24, 0
      %p249 = por %p247, %p248
      %p250 = scmp.ne.s32.totalorder %s239, %s242
      %p251 = scmp.eq.s32.totalorder %s29, 1
      %p252 = por %p250, %p251
      %p253 = scmp.ne.s32.totalorder %s242, %s243
      %p254 = scmp.eq.s32.totalorder %s29, 0
      %p255 = por %p253, %p254
      %p256 = scmp.ne.s32.totalorder %s242, %s243
      %p257 = scmp.eq.s32.totalorder %s30, 1
      %p258 = por %p256, %p257
      %p260 = scmp.ne.s32.totalorder %s243, %s259
      %p261 = scmp.eq.s32.totalorder %s30, 0
      %p262 = por %p260, %p261
      %s264 = sadd.s32 %s263, 1
      %p267 = scmp.eq.s32.totalorder %s24, 1
      %p268 = scmp.ne.s32.totalorder %s263, %s265
      %p269 = scmp.eq.s32.totalorder %s24, 0
      %p270 = por %p268, %p269
      %p271 = scmp.ne.s32.totalorder %s263, %s265
      %p272 = scmp.eq.s32.totalorder %s29, 1
      %p273 = por %p271, %p272
      %p274 = scmp.ne.s32.totalorder %s265, %s266
      %p275 = scmp.eq.s32.totalorder %s29, 0
      %p276 = por %p274, %p275
      %p277 = scmp.ne.s32.totalorder %s265, %s266
      %p278 = scmp.eq.s32.totalorder %s30, 1
      %p279 = por %p277, %p278
      %p281 = scmp.ne.s32.totalorder %s266, %s280
      %p282 = scmp.eq.s32.totalorder %s30, 0
      %p283 = por %p281, %p282
      %s284 = ssub.s32 %s31, %s50
      %s285 = ssub.s32 %s32, %s46
      %s286 = sor.u32 %s284, %s285
      %p287 = scmp.eq.s32.totalorder %s286, 0
      %s289 = sadd.s32 %s288, 1
      %s290 = scalar_select %p287, %s288, %s289
      %p293 = pneg %p287
      %p294 = scmp.eq.s32.totalorder %s24, 1
      %p295 = por %p293, %p294
      %p296 = scmp.ne.s32.totalorder %s288, %s291
      %p297 = scmp.eq.s32.totalorder %s24, 0
      %p298 = por %p296, %p297
      %p299 = scmp.ne.s32.totalorder %s288, %s291
      %p300 = scmp.eq.s32.totalorder %s29, 1
      %p301 = por %p299, %p300
      %p302 = scmp.ne.s32.totalorder %s291, %s292
      %p303 = scmp.eq.s32.totalorder %s29, 0
      %p304 = por %p302, %p303
      %p305 = scmp.ne.s32.totalorder %s291, %s292
      %p306 = scmp.eq.s32.totalorder %s30, 1
      %p307 = por %p305, %p306
      %p309 = scmp.ne.s32.totalorder %s292, %s308
      %p310 = scmp.eq.s32.totalorder %s30, 0
      %p311 = por %p309, %p310
      %p312 = scmp.le.s32.totalorder 1, %s24
      %p313 = scmp.lt.s32.totalorder %s24, 3
      %p314 = pnand %p312, %p313
      %p315 = pneg %p314
      // Predicated region
      $region9: #{tpu_custom_call.1} parent=5 // pred_check
        _
      $region10: #{tpu_custom_call.1} parent=5 // pred_check_branch
        %317 = sbr.rel (%p314) target = $region12
      $region11: #{tpu_custom_call.1} parent=5 // pred_region
        %s318 = ssub.s32 %s24, 1
        // Predicated region
        $region13: #{tpu_custom_call.1} parent=11 // pred_check
          %p319 = pneg %p165
        $region14: #{tpu_custom_call.1} parent=11 // pred_check_branch
          %321 = sbr.rel (%p319) target = $region16
        $region15: #{tpu_custom_call.1} parent=11 // pred_region
          %p322 = scmp.lt.s32.totalorder %s35, 0
          %s323 = scalar_select %p322, %s35, 0
          %s324 = smul.addr %s323, 8
          %s325 = scalar_lea.vmem %s3, %s324
        $region16: #{tpu_custom_call.1} parent=11 // pred_fallthru
          _
        // Predicated region
        $region17: #{tpu_custom_call.1} parent=11 // pred_check
          %p326 = pneg %p191
        $region18: #{tpu_custom_call.1} parent=11 // pred_check_branch
          %328 = sbr.rel (%p326) target = $region20
        $region19: #{tpu_custom_call.1} parent=11 // pred_region
          %s330 = ssub.s32 128, 128
          %331 = vsyncadd [#allocation13], %s330
          %s332 = smul.addr %s35, 128
          %s333 = scalar_lea.hbm %s4, %s332
          %s335 = sshll.u32 [#allocation12], 4
          %s336 = int_to_ptr.vmem [resolvable:$true] %s335
          %338 = dma.hbm_to_vmem [thread:$0]  %s333, 128, %s336, [#allocation13]
        $region20: #{tpu_custom_call.1} parent=11 // pred_fallthru
          _
        // Predicated region
        $region21: #{tpu_custom_call.1} parent=11 // pred_check
          %p339 = pneg %p223
        $region22: #{tpu_custom_call.1} parent=11 // pred_check_branch
          %341 = sbr.rel (%p339) target = $region24
        $region23: #{tpu_custom_call.1} parent=11 // pred_region
          %s342 = sadd.s32 %s35, %s36
          %p343 = scmp.gt.s32.totalorder %s342, 0
          %s344 = scalar_select %p343, %s342, 0
          %p345 = scmp.lt.s32.totalorder %s344, 0
          %s346 = scalar_select %p345, %s344, 0
          %s347 = smul.addr %s346, 8
          %s348 = scalar_lea.vmem %s5, %s347
          %s349 = sadd.s32 %s35, %s36
          %p350 = scmp.gt.s32.totalorder %s349, 0
          %s351 = scalar_select %p350, %s349, 0
        $region24: #{tpu_custom_call.1} parent=11 // pred_fallthru
          _
        // Predicated region
        $region25: #{tpu_custom_call.1} parent=11 // pred_check
          %p352 = pneg %p255
        $region26: #{tpu_custom_call.1} parent=11 // pred_check_branch
          %354 = sbr.rel (%p352) target = $region28
        $region27: #{tpu_custom_call.1} parent=11 // pred_region
          %s355 = sadd.s32 %s35, %s36
          %p356 = scmp.gt.s32.totalorder %s355, 0
          %s357 = scalar_select %p356, %s355, 0
          %s359 = ssub.s32 128, 128
          %360 = vsyncadd [#allocation13], %s359
          %s361 = smul.addr %s357, 128
          %s362 = scalar_lea.hbm %s6, %s361
          %s364 = sshll.u32 [#allocation14], 4
          %s365 = int_to_ptr.vmem [resolvable:$true] %s364
          %367 = dma.hbm_to_vmem [thread:$0]  %s362, 128, %s365, [#allocation13]
        $region28: #{tpu_custom_call.1} parent=11 // pred_fallthru
          _
        // Predicated region
        $region29: #{tpu_custom_call.1} parent=11 // pred_check
          %p368 = pneg %p276
        $region30: #{tpu_custom_call.1} parent=11 // pred_check_branch
          %370 = sbr.rel (%p368) target = $region32
        $region31: #{tpu_custom_call.1} parent=11 // pred_region
          _
        $region32: #{tpu_custom_call.1} parent=11 // pred_fallthru
          _
      $region12: #{tpu_custom_call.1} parent=5 // pred_fallthru
        _
      %p371 = scmp.lt.s32.totalorder %s24, 2
      // Predicated region
      $region33: #{tpu_custom_call.1} parent=5 // pred_check
        %p372 = pneg %p371
      $region34: #{tpu_custom_call.1} parent=5 // pred_check_branch
        %374 = sbr.rel (%p372) target = $region36
      $region35: #{tpu_custom_call.1} parent=5 // pred_region
        // Predicated region
        $region37: #{tpu_custom_call.1} parent=35 // pred_check
          %p375 = pneg %p65
        $region38: #{tpu_custom_call.1} parent=35 // pred_check_branch
          %377 = sbr.rel (%p375) target = $region40
        $region39: #{tpu_custom_call.1} parent=35 // pred_region
          %s378 = sand.u32 %s55, 1
          %s379 = scalar_lea.sflag [#allocation7], %s378
          %s380 = sand.u32 %s55, 1
          %s381 = smul.addr %s380, 16
          %s382 = scalar_lea.vmem [#allocation6], %s381
          %s384 = ssub.s32 256, 256
          %385 = vsyncadd %s379, %s384
          %s386 = smul.addr %s31, 4
          %s387 = sadd.s32 %s32, %s386
          %s388 = smul.addr %s387, 64
          %s389 = scalar_lea.hbm %s0, %s388
          %s390 = sshll.u32 %s382, 4
          %s391 = int_to_ptr.vmem [resolvable:$true] %s390
          %396 = dma.hbm_to_vmem [thread:$0]  %s389, 256, %s391, %s379, 64, 64, 4
        $region40: #{tpu_custom_call.1} parent=35 // pred_fallthru
          _
        // Predicated region
        $region41: #{tpu_custom_call.1} parent=35 // pred_check
          %p397 = pneg %p99
        $region42: #{tpu_custom_call.1} parent=35 // pred_check_branch
          %399 = sbr.rel (%p397) target = $region44
        $region43: #{tpu_custom_call.1} parent=35 // pred_region
          %s400 = sand.u32 %s24, 1
          %s401 = scalar_lea.sflag [#allocation10], %s400
          %s402 = sand.u32 %s89, 1
          %s403 = smul.addr %s402, 16
          %s404 = scalar_lea.vmem [#allocation9], %s403
          %s405 = sadd.s32 %s32, %s33
          %p406 = scmp.gt.s32.totalorder %s405, 0
          %s407 = scalar_select %p406, %s405, 0
          %s409 = ssub.s32 256, 256
          %410 = vsyncadd %s401, %s409
          %s411 = smul.addr %s31, 4
          %s412 = sadd.s32 %s407, %s411
          %s413 = smul.addr %s412, 64
          %s414 = scalar_lea.hbm %s1, %s413
          %s415 = sshll.u32 %s404, 4
          %s416 = int_to_ptr.vmem [resolvable:$true] %s415
          %421 = dma.hbm_to_vmem [thread:$0]  %s414, 256, %s416, %s401, 64, 64, 4
        $region44: #{tpu_custom_call.1} parent=35 // pred_fallthru
          _
        // Predicated region
        $region45: #{tpu_custom_call.1} parent=35 // pred_check
          %p422 = pneg %p133
        $region46: #{tpu_custom_call.1} parent=35 // pred_check_branch
          %424 = sbr.rel (%p422) target = $region48
        $region47: #{tpu_custom_call.1} parent=35 // pred_region
          %s425 = sand.u32 %s24, 1
          %s426 = scalar_lea.sflag [#allocation10], %s425
          %s427 = sand.u32 %s123, 1
          %s428 = smul.addr %s427, 16
          %s429 = scalar_lea.vmem [#allocation11], %s428
          %s430 = sadd.s32 %s32, %s33
          %p431 = scmp.gt.s32.totalorder %s430, 0
          %s432 = scalar_select %p431, %s430, 0
          %s434 = ssub.s32 256, 256
          %435 = vsyncadd %s426, %s434
          %s436 = smul.addr %s31, 4
          %s437 = sadd.s32 %s432, %s436
          %s438 = smul.addr %s437, 64
          %s439 = scalar_lea.hbm %s2, %s438
          %s440 = sshll.u32 %s429, 4
          %s441 = int_to_ptr.vmem [resolvable:$true] %s440
          %446 = dma.hbm_to_vmem [thread:$0]  %s439, 256, %s441, %s426, 64, 64, 4
        $region48: #{tpu_custom_call.1} parent=35 // pred_fallthru
          _
      $region36: #{tpu_custom_call.1} parent=5 // pred_fallthru
        _
      %p447 = scmp.le.s32.totalorder 1, %s24
      %p448 = scmp.lt.s32.totalorder %s24, 3
      %p449 = pnand %p447, %p448
      %p450 = pneg %p449
      // Predicated region
      $region49: #{tpu_custom_call.1} parent=5 // pred_check
        _
      $region50: #{tpu_custom_call.1} parent=5 // pred_check_branch
        %452 = sbr.rel (%p449) target = $region52
      $region51: #{tpu_custom_call.1} parent=5 // pred_region
        %s453 = ssub.s32 %s24, 1
        %s454 = sand.u32 %s58, 1
        %s455 = scalar_lea.sflag [#allocation7], %s454
        %s456 = sand.u32 %s58, 1
        %s457 = smul.addr %s456, 16
        %s458 = scalar_lea.vmem [#allocation6], %s457
        // Predicated region
        $region53: #{tpu_custom_call.1} parent=51 // pred_check
          %p459 = pneg %p71
        $region54: #{tpu_custom_call.1} parent=51 // pred_check_branch
          %461 = sbr.rel (%p459) target = $region56
        $region55: #{tpu_custom_call.1} parent=51 // pred_region
          %462 = dma.done %s455, 256
        $region56: #{tpu_custom_call.1} parent=51 // pred_fallthru
          _
        %s463 = sand.u32 %s29, 1
        %s464 = scalar_lea.sflag [#allocation10], %s463
        %s465 = sand.u32 %s92, 1
        %s466 = smul.addr %s465, 16
        %s467 = scalar_lea.vmem [#allocation9], %s466
        // Predicated region
        $region57: #{tpu_custom_call.1} parent=51 // pred_check
          %p468 = pneg %p105
        $region58: #{tpu_custom_call.1} parent=51 // pred_check_branch
          %470 = sbr.rel (%p468) target = $region60
        $region59: #{tpu_custom_call.1} parent=51 // pred_region
          %471 = dma.done %s464, 256
        $region60: #{tpu_custom_call.1} parent=51 // pred_fallthru
          _
        %s472 = sand.u32 %s29, 1
        %s473 = scalar_lea.sflag [#allocation10], %s472
        %s474 = sand.u32 %s126, 1
        %s475 = smul.addr %s474, 16
        %s476 = scalar_lea.vmem [#allocation11], %s475
        // Predicated region
        $region61: #{tpu_custom_call.1} parent=51 // pred_check
          %p477 = pneg %p139
        $region62: #{tpu_custom_call.1} parent=51 // pred_check_branch
          %479 = sbr.rel (%p477) target = $region64
        $region63: #{tpu_custom_call.1} parent=51 // pred_region
          %480 = dma.done %s473, 256
        $region64: #{tpu_custom_call.1} parent=51 // pred_fallthru
          _
        // Predicated region
        $region65: #{tpu_custom_call.1} parent=51 // pred_check
          %p481 = pneg %p191
        $region66: #{tpu_custom_call.1} parent=51 // pred_check_branch
          %483 = sbr.rel (%p481) target = $region68
        $region67: #{tpu_custom_call.1} parent=51 // pred_region
          %484 = dma.done [#allocation13], 128
        $region68: #{tpu_custom_call.1} parent=51 // pred_fallthru
          _
        // Predicated region
        $region69: #{tpu_custom_call.1} parent=51 // pred_check
          %p485 = pneg %p255
        $region70: #{tpu_custom_call.1} parent=51 // pred_check_branch
          %487 = sbr.rel (%p485) target = $region72
        $region71: #{tpu_custom_call.1} parent=51 // pred_region
          %488 = dma.done [#allocation13], 128
        $region72: #{tpu_custom_call.1} parent=51 // pred_fallthru
          _
        %s489 = sand.u32 %s58, 1
        %s490 = scalar_lea.sflag [#allocation7], %s489
        %s491 = sand.u32 %s58, 1
        %s492 = smul.addr %s491, 16
        %s493 = scalar_lea.vmem [#allocation6], %s492
        %p494 = pneg %p71
        %p495 = pneg %p68
        %s496 = sand.u32 %s29, 1
        %s497 = scalar_lea.sflag [#allocation10], %s496
        %s498 = sand.u32 %s92, 1
        %s499 = smul.addr %s498, 16
        %s500 = scalar_lea.vmem [#allocation9], %s499
        %p501 = pneg %p105
        %p502 = pneg %p102
        %s503 = sand.u32 %s29, 1
        %s504 = scalar_lea.sflag [#allocation10], %s503
        %s505 = sand.u32 %s126, 1
        %s506 = smul.addr %s505, 16
        %s507 = scalar_lea.vmem [#allocation11], %s506
        %p508 = pneg %p139
        %p509 = pneg %p136
        %p510 = scmp.lt.s32.totalorder %s35, 0
        %s511 = scalar_select %p510, %s35, 0
        %s512 = smul.addr %s511, 8
        %s513 = scalar_lea.vmem %s3, %s512
        %p514 = pneg %p165
        %p515 = pneg %p162
        %p516 = pneg %p191
        %p517 = pneg %p188
        %s518 = sadd.s32 %s35, %s36
        %p519 = scmp.gt.s32.totalorder %s518, 0
        %s520 = scalar_select %p519, %s518, 0
        %p521 = scmp.lt.s32.totalorder %s520, 0
        %s522 = scalar_select %p521, %s520, 0
        %s523 = smul.addr %s522, 8
        %s524 = scalar_lea.vmem %s5, %s523
        %p525 = pneg %p223
        %p526 = pneg %p220
        %p527 = pneg %p255
        %p528 = pneg %p252
        %p529 = pneg %p276
        %p530 = pneg %p273
        %p531 = pneg %p304
        %p532 = pneg %p301
        %s533 = sand.u32 %s291, 1
        %s534 = scalar_lea.sflag [#allocation8], %s533
        %s535 = sand.u32 %s291, 1
        %s536 = smul.addr %s535, 16
        %s537 = scalar_lea.vmem [#allocation15], %s536
        %s538 = sadd.s32 %s35, %s36
        %p539 = scmp.gt.s32.totalorder %s538, 0
        %s540 = scalar_select %p539, %s538, 0
        %s541 = sadd.s32 %s35, %s36
        %p542 = scmp.gt.s32.totalorder %s541, 0
        %s543 = scalar_select %p542, %s541, 0
        %p544 = scmp.lt.s32.totalorder %s35, 0
        %s545 = scalar_select %p544, %s35, 0
        %s546 = smul.addr %s545, 8
        %s547 = scalar_lea.vmem %s3, %s546
        %s548 = sadd.s32 %s35, %s36
        %p549 = scmp.gt.s32.totalorder %s548, 0
        %s550 = scalar_select %p549, %s548, 0
        %p551 = scmp.lt.s32.totalorder %s550, 0
        %s552 = scalar_select %p551, %s550, 0
        %s553 = smul.addr %s552, 8
        %s554 = scalar_lea.vmem %s5, %s553
        %s555 = sadd.s32 %s35, %s36
        %p556 = scmp.gt.s32.totalorder %s555, 0
        %s557 = scalar_select %p556, %s555, 0
        %s558 = sadd.s32 %s35, %s36
        %p559 = scmp.gt.s32.totalorder %s558, 0
        %s560 = scalar_select %p559, %s558, 0
        %s562 = sadd.s32 %s35, %s36
        %p563 = scmp.eq.s32.totalorder %s36, 0
        // Predicated region
        $region73: #{tpu_custom_call.1} parent=51 // pred_check
          %p564 = pneg %p563
        $region74: #{tpu_custom_call.1} parent=51 // pred_check_branch
          %566 = sbr.rel (%p564) target = $region76
        $region75: #{tpu_custom_call.1} parent=51 // pred_region
          %vm567 = vcmask 7168
          %568 = vst.msk [vmem:[#allocation3] sm:$0xff] %vm567, -1e+30
          %569 = vst.msk [vmem:[#allocation3 + $0x8] sm:$0xff] %vm567, -1e+30
          %570 = vst.msk [vmem:[#allocation3 + $0x10] sm:$0xff] %vm567, -1e+30
          %571 = vst.msk [vmem:[#allocation3 + $0x18] sm:$0xff] %vm567, -1e+30
          %572 = vst.msk [vmem:[#allocation4] sm:$0xff] %vm567, 0.0
          %573 = vst.msk [vmem:[#allocation4 + $0x8] sm:$0xff] %vm567, 0.0
          %574 = vst.msk [vmem:[#allocation4 + $0x10] sm:$0xff] %vm567, 0.0
          %575 = vst.msk [vmem:[#allocation4 + $0x18] sm:$0xff] %vm567, 0.0
          %vm576 = vcmask 64512
          %577 = vst.msk [vmem:[#allocation5] sm:$0xff] %vm576, 0.0
          %578 = vst.msk [vmem:[#allocation5 + $0x8] sm:$0xff] %vm576, 0.0
          %579 = vst.msk [vmem:[#allocation5 + $0x10] sm:$0xff] %vm576, 0.0
          %580 = vst.msk [vmem:[#allocation5 + $0x18] sm:$0xff] %vm576, 0.0
          %v581 = vld [vmem:[%s458] sm:$0xf]
          %v582 = vld [vmem:[%s458 + $0x4] sm:$0xf]
          %v583 = vld [vmem:[%s458 + $0x8] sm:$0xf]
          %v584 = vld [vmem:[%s458 + $0xc] sm:$0xf]
          %v585 = vld [vmem:[%s7] sm:$0xf]
          %v590 = vunpack.c.l.b16 %v581
          %v591 = vunpack.c.l.b16 %v582
          %v592 = vunpack.c.l.b16 %v583
          %v593 = vunpack.c.l.b16 %v584
          %v594 = vpack.c.b16 %v591, %v590
          %v595 = vpack.c.b16 %v593, %v592
          %v597 = vsel %vm576, %v594, 0
          %v600 = vsel %vm576, %v595, 0
          %vm602 = vcmask 1043456
          %v604 = vsel %vm602, %v585, 0
          %606 = vmatprep.subr.bf16.mxu0 0
          %607 = vmatpush1.bf16.msra.mxu0 %v604
          %608 = vmatprep.subr.bf16.mxu0 0
          %609 = vmatpush1.bf16.msra.mxu0 0
          %610 = vmatprep.subr.bf16.mxu0 0
          %611 = vmatpush1.bf16.msra.mxu0 0
          %612 = vmatprep.subr.bf16.mxu0 0
          %613 = vmatpush1.bf16.msra.mxu0 0
          %614 = vmatprep.subr.bf16.mxu0 0
          %615 = vmatpush1.bf16.msra.mxu0 0
          %616 = vmatprep.subr.bf16.mxu0 0
          %617 = vmatpush1.bf16.msra.mxu0 0
          %618 = vmatprep.subr.bf16.mxu0 0
          %619 = vmatpush1.bf16.msra.mxu0 0
          %620 = vmatprep.subr.bf16.mxu0 0
          %621 = vmatpush1.bf16.msra.mxu0 0
          %622 = vmatprep.subr.bf16.mxu0 0
          %623 = vmatpush1.bf16.msra.mxu0 0
          %624 = vmatprep.subr.bf16.mxu0 0
          %625 = vmatpush1.bf16.msra.mxu0 0
          %626 = vmatprep.subr.bf16.mxu0 0
          %627 = vmatpush1.bf16.msra.mxu0 0
          %628 = vmatprep.subr.bf16.mxu0 0
          %629 = vmatpush1.bf16.msra.mxu0 0
          %630 = vmatprep.subr.bf16.mxu0 0
          %631 = vmatpush1.bf16.msra.mxu0 0
          %632 = vmatprep.subr.bf16.mxu0 0
          %633 = vmatpush1.bf16.msra.mxu0 0
          %634 = vmatprep.subr.bf16.mxu0 0
          %635 = vmatpush1.bf16.msra.mxu0 0
          %636 = vmatprep.subr.bf16.mxu0 0
          %637 = vmatpush1.bf16.msra.mxu0 0
          %638 = vmatprep.mubr.bf16.mxu0 0
          %639 = vmatmul.mubr.bf16.gmra.mrb[0].mxu0 %v597
          %v640 = vpop.f32.mrb[0].mxu0
          %v641 = vadd.f32 0.0, %v640
          %v642 = vpop.f32.mrb[0].mxu0
          %v643 = vpop.f32.mrb[0].mxu0
          %v644 = vadd.f32 0.0, %v643
          %v645 = vpop.f32.mrb[0].mxu0
          %646 = vmatprep.mubr.bf16.mxu0 0
          %647 = vmatmul.mubr.bf16.gmra.mrb[0].mxu0 %v600
          %v648 = vpop.f32.mrb[0].mxu0
          %v649 = vadd.f32 0.0, %v648
          %v650 = vpop.f32.mrb[0].mxu0
          %v651 = vpop.f32.mrb[0].mxu0
          %v652 = vadd.f32 0.0, %v651
          %v653 = vpop.f32.mrb[0].mxu0
          %654 = vdwg.mxu0
          %v655 = vunpack.c.l.bf16 %v581
          %v656 = vunpack.c.l.bf16 %v582
          %v657 = vunpack.c.l.bf16 %v583
          %v658 = vunpack.c.l.bf16 %v584
          %v659 = vld [vmem:[%s547] sm:$0xff]
          %v660 = vmul.f32 %v655, %v659
          %v661 = vmul.f32 %v656, %v659
          %v662 = vmul.f32 %v657, %v659
          %v663 = vmul.f32 %v658, %v659
          %v664 = vld [vmem:[#allocation12] sm:$0xff]
          %v665 = vmul.f32 %v641, %v664
          %v666 = vmul.f32 %v644, %v664
          %v667 = vmul.f32 %v649, %v664
          %v668 = vmul.f32 %v652, %v664
          %v669 = vadd.f32 %v660, %v665
          %v670 = vadd.f32 %v661, %v666
          %v671 = vadd.f32 %v662, %v667
          %v672 = vadd.f32 %v663, %v668
          %v673 = vmul.f32 %v669, 0.35355338
          %v674 = vmul.f32 %v670, 0.35355338
          %v675 = vmul.f32 %v671, 0.35355338
          %v676 = vmul.f32 %v672, 0.35355338
          %v677 = vpack.c.bf16 %v673, %v673
          %v678 = vpack.c.bf16 %v674, %v674
          %v679 = vpack.c.bf16 %v675, %v675
          %v680 = vpack.c.bf16 %v676, %v676
          %vm681 = vcmask 60416
          %682 = vst.msk [vmem:[#allocation2] sm:$0xf] %vm681, %v677
          %683 = vst.msk [vmem:[#allocation2 + $0x4] sm:$0xf] %vm681, %v678
          %684 = vst.msk [vmem:[#allocation2 + $0x8] sm:$0xf] %vm681, %v679
          %685 = vst.msk [vmem:[#allocation2 + $0xc] sm:$0xf] %vm681, %v680
        $region76: #{tpu_custom_call.1} parent=51 // pred_fallthru
          _
        %s686 = ssub.s32 0, %s36
        %s687 = smul.u32 %s686, 8
        %p688 = scmp.ge.s32.totalorder %s562, 0
        %p689 = scmp.ge.s32.totalorder %s687, 7
        %s690 = sadd.s32 %s687, 7
        %p691 = scmp.le.s32.totalorder %s690, 4
        %p692 = pnand %p689, %p691
        %p693 = pneg %p692
        %p694 = pnand %p688, %p693
        %p695 = pneg %p694
        // Predicated region
        $region77: #{tpu_custom_call.1} parent=51 // pred_check
          _
        $region78: #{tpu_custom_call.1} parent=51 // pred_check_branch
          %697 = sbr.rel (%p694) target = $region80
        $region79: #{tpu_custom_call.1} parent=51 // pred_region
          %v698 = vld [vmem:[%s467] sm:$0xf]
          %v699 = vld [vmem:[%s467 + $0x4] sm:$0xf]
          %v700 = vld [vmem:[%s467 + $0x8] sm:$0xf]
          %v701 = vld [vmem:[%s467 + $0xc] sm:$0xf]
          %v702 = vld [vmem:[%s7] sm:$0xf]
          %v707 = vunpack.c.l.b16 %v698
          %v708 = vunpack.c.l.b16 %v699
          %v709 = vunpack.c.l.b16 %v700
          %v710 = vunpack.c.l.b16 %v701
          %v711 = vpack.c.b16 %v708, %v707
          %v712 = vpack.c.b16 %v710, %v709
          %vm713 = vcmask 64512
          %v715 = vsel %vm713, %v711, 0
          %v718 = vsel %vm713, %v712, 0
          %vm720 = vcmask 1043456
          %v722 = vsel %vm720, %v702, 0
          %724 = vmatprep.subr.bf16.mxu0 0
          %725 = vmatpush1.bf16.msra.mxu0 %v722
          %726 = vmatprep.subr.bf16.mxu0 0
          %727 = vmatpush1.bf16.msra.mxu0 0
          %728 = vmatprep.subr.bf16.mxu0 0
          %729 = vmatpush1.bf16.msra.mxu0 0
          %730 = vmatprep.subr.bf16.mxu0 0
          %731 = vmatpush1.bf16.msra.mxu0 0
          %732 = vmatprep.subr.bf16.mxu0 0
          %733 = vmatpush1.bf16.msra.mxu0 0
          %734 = vmatprep.subr.bf16.mxu0 0
          %735 = vmatpush1.bf16.msra.mxu0 0
          %736 = vmatprep.subr.bf16.mxu0 0
          %737 = vmatpush1.bf16.msra.mxu0 0
          %738 = vmatprep.subr.bf16.mxu0 0
          %739 = vmatpush1.bf16.msra.mxu0 0
          %740 = vmatprep.subr.bf16.mxu0 0
          %741 = vmatpush1.bf16.msra.mxu0 0
          %742 = vmatprep.subr.bf16.mxu0 0
          %743 = vmatpush1.bf16.msra.mxu0 0
          %744 = vmatprep.subr.bf16.mxu0 0
          %745 = vmatpush1.bf16.msra.mxu0 0
          %746 = vmatprep.subr.bf16.mxu0 0
          %747 = vmatpush1.bf16.msra.mxu0 0
          %748 = vmatprep.subr.bf16.mxu0 0
          %749 = vmatpush1.bf16.msra.mxu0 0
          %750 = vmatprep.subr.bf16.mxu0 0
          %751 = vmatpush1.bf16.msra.mxu0 0
          %752 = vmatprep.subr.bf16.mxu0 0
          %753 = vmatpush1.bf16.msra.mxu0 0
          %754 = vmatprep.subr.bf16.mxu0 0
          %755 = vmatpush1.bf16.msra.mxu0 0
          %756 = vmatprep.mubr.bf16.mxu0 0
          %757 = vmatmul.mubr.bf16.gmra.mrb[0].mxu0 %v715
          %v758 = vpop.f32.mrb[0].mxu0
          %v759 = vadd.f32 0.0, %v758
          %v760 = vpop.f32.mrb[0].mxu0
          %v761 = vpop.f32.mrb[0].mxu0
          %v762 = vadd.f32 0.0, %v761
          %v763 = vpop.f32.mrb[0].mxu0
          %764 = vmatprep.mubr.bf16.mxu0 0
          %765 = vmatmul.mubr.bf16.gmra.mrb[0].mxu0 %v718
          %v766 = vpop.f32.mrb[0].mxu0
          %v767 = vadd.f32 0.0, %v766
          %v768 = vpop.f32.mrb[0].mxu0
          %v769 = vpop.f32.mrb[0].mxu0
          %v770 = vadd.f32 0.0, %v769
          %v771 = vpop.f32.mrb[0].mxu0
          %772 = vdwg.mxu0
          %v773 = vunpack.c.l.bf16 %v698
          %v774 = vunpack.c.l.bf16 %v699
          %v775 = vunpack.c.l.bf16 %v700
          %v776 = vunpack.c.l.bf16 %v701
          %v777 = vld [vmem:[%s554] sm:$0xff]
          %v778 = vmul.f32 %v773, %v777
          %v779 = vmul.f32 %v774, %v777
          %v780 = vmul.f32 %v775, %v777
          %v781 = vmul.f32 %v776, %v777
          %v782 = vld [vmem:[#allocation14] sm:$0xff]
          %v783 = vmul.f32 %v759, %v782
          %v784 = vmul.f32 %v762, %v782
          %v785 = vmul.f32 %v767, %v782
          %v786 = vmul.f32 %v770, %v782
          %v787 = vadd.f32 %v778, %v783
          %v788 = vadd.f32 %v779, %v784
          %v789 = vadd.f32 %v780, %v785
          %v790 = vadd.f32 %v781, %v786
          %v791 = vpack.c.bf16 %v787, %v787
          %v792 = vpack.c.bf16 %v788, %v788
          %v793 = vpack.c.bf16 %v789, %v789
          %v794 = vpack.c.bf16 %v790, %v790
          %v795 = vld [vmem:[%s476] sm:$0xf]
          %v796 = vld [vmem:[%s476 + $0x4] sm:$0xf]
          %v797 = vld [vmem:[%s476 + $0x8] sm:$0xf]
          %v798 = vld [vmem:[%s476 + $0xc] sm:$0xf]
          %v799 = vld [vmem:[#allocation2] sm:$0xf]
          %v800 = vld [vmem:[#allocation2 + $0x4] sm:$0xf]
          %v801 = vld [vmem:[#allocation2 + $0x8] sm:$0xf]
          %v802 = vld [vmem:[#allocation2 + $0xc] sm:$0xf]
          %v804 = vsel %vm713, %v799, 0
          %v807 = vsel %vm713, %v791, 0
          %809 = vmatprep.subr.bf16.mxu0 0
          %810 = vmatpush1.bf16.xpose.msra.mxu0 %v807
          %811 = vmatprep.subr.bf16.mxu0 0
          %812 = vmatpush1.bf16.xpose.msra.mxu0 0
          %813 = vmatprep.subr.bf16.mxu0 0
          %814 = vmatpush1.bf16.xpose.msra.mxu0 0
          %815 = vmatprep.subr.bf16.mxu0 0
          %816 = vmatpush1.bf16.xpose.msra.mxu0 0
          %817 = vmatprep.subr.bf16.mxu0 0
          %818 = vmatpush1.bf16.xpose.msra.mxu0 0
          %819 = vmatprep.subr.bf16.mxu0 0
          %820 = vmatpush1.bf16.xpose.msra.mxu0 0
          %821 = vmatprep.subr.bf16.mxu0 0
          %822 = vmatpush1.bf16.xpose.msra.mxu0 0
          %823 = vmatprep.subr.bf16.mxu0 0
          %824 = vmatpush1.bf16.xpose.msra.mxu0 0
          %825 = vmatprep.subr.bf16.mxu0 0
          %826 = vmatpush1.bf16.xpose.msra.mxu0 0
          %827 = vmatprep.subr.bf16.mxu0 0
          %828 = vmatpush1.bf16.xpose.msra.mxu0 0
          %829 = vmatprep.subr.bf16.mxu0 0
          %830 = vmatpush1.bf16.xpose.msra.mxu0 0
          %831 = vmatprep.subr.bf16.mxu0 0
          %832 = vmatpush1.bf16.xpose.msra.mxu0 0
          %833 = vmatprep.subr.bf16.mxu0 0
          %834 = vmatpush1.bf16.xpose.msra.mxu0 0
          %835 = vmatprep.subr.bf16.mxu0 0
          %836 = vmatpush1.bf16.xpose.msra.mxu0 0
          %837 = vmatprep.subr.bf16.mxu0 0
          %838 = vmatpush1.bf16.xpose.msra.mxu0 0
          %839 = vmatprep.subr.bf16.mxu0 0
          %840 = vmatpush1.bf16.xpose.msra.mxu0 0
          %841 = vmatprep.mubr.bf16.mxu0 0
          %842 = vmatmul.mubr.bf16.gmra.mrb[0].mxu0 %v804
          %v843 = vpop.f32.mrb[0].mxu0
          %v844 = vadd.f32 0.0, %v843
          %v845 = vpop.f32.mrb[0].mxu0
          %v846 = vpop.f32.mrb[0].mxu0
          %v847 = vpop.f32.mrb[0].mxu0
          %848 = vdwg.mxu0
          %v850 = vsel %vm713, %v800, 0
          %v853 = vsel %vm713, %v792, 0
          %855 = vmatprep.subr.bf16.mxu0 0
          %856 = vmatpush1.bf16.xpose.msra.mxu0 %v853
          %857 = vmatprep.subr.bf16.mxu0 0
          %858 = vmatpush1.bf16.xpose.msra.mxu0 0
          %859 = vmatprep.subr.bf16.mxu0 0
          %860 = vmatpush1.bf16.xpose.msra.mxu0 0
          %861 = vmatprep.subr.bf16.mxu0 0
          %862 = vmatpush1.bf16.xpose.msra.mxu0 0
          %863 = vmatprep.subr.bf16.mxu0 0
          %864 = vmatpush1.bf16.xpose.msra.mxu0 0
          %865 = vmatprep.subr.bf16.mxu0 0
          %866 = vmatpush1.bf16.xpose.msra.mxu0 0
          %867 = vmatprep.subr.bf16.mxu0 0
          %868 = vmatpush1.bf16.xpose.msra.mxu0 0
          %869 = vmatprep.subr.bf16.mxu0 0
          %870 = vmatpush1.bf16.xpose.msra.mxu0 0
          %871 = vmatprep.subr.bf16.mxu0 0
          %872 = vmatpush1.bf16.xpose.msra.mxu0 0
          %873 = vmatprep.subr.bf16.mxu0 0
          %874 = vmatpush1.bf16.xpose.msra.mxu0 0
          %875 = vmatprep.subr.bf16.mxu0 0
          %876 = vmatpush1.bf16.xpose.msra.mxu0 0
          %877 = vmatprep.subr.bf16.mxu0 0
          %878 = vmatpush1.bf16.xpose.msra.mxu0 0
          %879 = vmatprep.subr.bf16.mxu0 0
          %880 = vmatpush1.bf16.xpose.msra.mxu0 0
          %881 = vmatprep.subr.bf16.mxu0 0
          %882 = vmatpush1.bf16.xpose.msra.mxu0 0
          %883 = vmatprep.subr.bf16.mxu0 0
          %884 = vmatpush1.bf16.xpose.msra.mxu0 0
          %885 = vmatprep.subr.bf16.mxu0 0
          %886 = vmatpush1.bf16.xpose.msra.mxu0 0
          %887 = vmatprep.mubr.bf16.mxu0 0
          %888 = vmatmul.mubr.bf16.gmra.mrb[0].mxu0 %v850
          %v889 = vpop.f32.mrb[0].mxu0
          %v890 = vadd.f32 0.0, %v889
          %v891 = vpop.f32.mrb[0].mxu0
          %v892 = vpop.f32.mrb[0].mxu0
          %v893 = vpop.f32.mrb[0].mxu0
          %894 = vdwg.mxu0
          %v896 = vsel %vm713, %v801, 0
          %v899 = vsel %vm713, %v793, 0
          %901 = vmatprep.subr.bf16.mxu0 0
          %902 = vmatpush1.bf16.xpose.msra.mxu0 %v899
          %903 = vmatprep.subr.bf16.mxu0 0
          %904 = vmatpush1.bf16.xpose.msra.mxu0 0
          %905 = vmatprep.subr.bf16.mxu0 0
          %906 = vmatpush1.bf16.xpose.msra.mxu0 0
          %907 = vmatprep.subr.bf16.mxu0 0
          %908 = vmatpush1.bf16.xpose.msra.mxu0 0
          %909 = vmatprep.subr.bf16.mxu0 0
          %910 = vmatpush1.bf16.xpose.msra.mxu0 0
          %911 = vmatprep.subr.bf16.mxu0 0
          %912 = vmatpush1.bf16.xpose.msra.mxu0 0
          %913 = vmatprep.subr.bf16.mxu0 0
          %914 = vmatpush1.bf16.xpose.msra.mxu0 0
          %915 = vmatprep.subr.bf16.mxu0 0
          %916 = vmatpush1.bf16.xpose.msra.mxu0 0
          %917 = vmatprep.subr.bf16.mxu0 0
          %918 = vmatpush1.bf16.xpose.msra.mxu0 0
          %919 = vmatprep.subr.bf16.mxu0 0
          %920 = vmatpush1.bf16.xpose.msra.mxu0 0
          %921 = vmatprep.subr.bf16.mxu0 0
          %922 = vmatpush1.bf16.xpose.msra.mxu0 0
          %923 = vmatprep.subr.bf16.mxu0 0
          %924 = vmatpush1.bf16.xpose.msra.mxu0 0
          %925 = vmatprep.subr.bf16.mxu0 0
          %926 = vmatpush1.bf16.xpose.msra.mxu0 0
          %927 = vmatprep.subr.bf16.mxu0 0
          %928 = vmatpush1.bf16.xpose.msra.mxu0 0
          %929 = vmatprep.subr.bf16.mxu0 0
          %930 = vmatpush1.bf16.xpose.msra.mxu0 0
          %931 = vmatprep.subr.bf16.mxu0 0
          %932 = vmatpush1.bf16.xpose.msra.mxu0 0
          %933 = vmatprep.mubr.bf16.mxu0 0
          %934 = vmatmul.mubr.bf16.gmra.mrb[0].mxu0 %v896
          %v935 = vpop.f32.mrb[0].mxu0
          %v936 = vadd.f32 0.0, %v935
          %v937 = vpop.f32.mrb[0].mxu0
          %v938 = vpop.f32.mrb[0].mxu0
          %v939 = vpop.f32.mrb[0].mxu0
          %940 = vdwg.mxu0
          %v942 = vsel %vm713, %v802, 0
          %v945 = vsel %vm713, %v794, 0
          %947 = vmatprep.subr.bf16.mxu0 0
          %948 = vmatpush1.bf16.xpose.msra.mxu0 %v945
          %949 = vmatprep.subr.bf16.mxu0 0
          %950 = vmatpush1.bf16.xpose.msra.mxu0 0
          %951 = vmatprep.subr.bf16.mxu0 0
          %952 = vmatpush1.bf16.xpose.msra.mxu0 0
          %953 = vmatprep.subr.bf16.mxu0 0
          %954 = vmatpush1.bf16.xpose.msra.mxu0 0
          %955 = vmatprep.subr.bf16.mxu0 0
          %956 = vmatpush1.bf16.xpose.msra.mxu0 0
          %957 = vmatprep.subr.bf16.mxu0 0
          %958 = vmatpush1.bf16.xpose.msra.mxu0 0
          %959 = vmatprep.subr.bf16.mxu0 0
          %960 = vmatpush1.bf16.xpose.msra.mxu0 0
          %961 = vmatprep.subr.bf16.mxu0 0
          %962 = vmatpush1.bf16.xpose.msra.mxu0 0
          %963 = vmatprep.subr.bf16.mxu0 0
          %964 = vmatpush1.bf16.xpose.msra.mxu0 0
          %965 = vmatprep.subr.bf16.mxu0 0
          %966 = vmatpush1.bf16.xpose.msra.mxu0 0
          %967 = vmatprep.subr.bf16.mxu0 0
          %968 = vmatpush1.bf16.xpose.msra.mxu0 0
          %969 = vmatprep.subr.bf16.mxu0 0
          %970 = vmatpush1.bf16.xpose.msra.mxu0 0
          %971 = vmatprep.subr.bf16.mxu0 0
          %972 = vmatpush1.bf16.xpose.msra.mxu0 0
          %973 = vmatprep.subr.bf16.mxu0 0
          %974 = vmatpush1.bf16.xpose.msra.mxu0 0
          %975 = vmatprep.subr.bf16.mxu0 0
          %976 = vmatpush1.bf16.xpose.msra.mxu0 0
          %977 = vmatprep.subr.bf16.mxu0 0
          %978 = vmatpush1.bf16.xpose.msra.mxu0 0
          %979 = vmatprep.mubr.bf16.mxu0 0
          %980 = vmatmul.mubr.bf16.gmra.mrb[0].mxu0 %v942
          %v981 = vpop.f32.mrb[0].mxu0
          %v982 = vadd.f32 0.0, %v981
          %v983 = vpop.f32.mrb[0].mxu0
          %v984 = vpop.f32.mrb[0].mxu0
          %v985 = vpop.f32.mrb[0].mxu0
          %986 = vdwg.mxu0
          %v987 = vld [vmem:[#allocation3] sm:$0xff]
          %v988 = vld [vmem:[#allocation3 + $0x8] sm:$0xff]
          %v989 = vld [vmem:[#allocation3 + $0x10] sm:$0xff]
          %v990 = vld [vmem:[#allocation3 + $0x18] sm:$0xff]
          %v991 = vsel %vm713, %v844, -inf
          %992 = vmax.xlane.f32.xlu0 %v991
          %v993 = vpop.xlane.xlu0 %992
          %v994 = vsel %vm713, %v890, -inf
          %995 = vmax.xlane.f32.xlu0 %v994
          %v996 = vpop.xlane.xlu0 %995
          %v997 = vsel %vm713, %v936, -inf
          %998 = vmax.xlane.f32.xlu0 %v997
          %v999 = vpop.xlane.xlu0 %998
          %v1000 = vsel %vm713, %v982, -inf
          %1001 = vmax.xlane.f32.xlu0 %v1000
          %v1002 = vpop.xlane.xlu0 %1001
          %v1003 = vmax.f32 %v987, %v993
          %v1004 = vmax.f32 %v988, %v996
          %v1005 = vmax.f32 %v989, %v999
          %v1006 = vmax.f32 %v990, %v1002
          %v1007 = vsub.f32 %v987, %v1003
          %v1008 = vsub.f32 %v988, %v1004
          %v1009 = vsub.f32 %v989, %v1005
          %v1010 = vsub.f32 %v990, %v1006
          %v1011 = vmul.f32 %v1007, 1.442695
          %v1012 = vpow.pop %v1011
          %v1013 = vmul.f32 %v1008, 1.442695
          %v1014 = vpow.pop %v1013
          %v1015 = vmul.f32 %v1009, 1.442695
          %v1016 = vpow.pop %v1015
          %v1017 = vmul.f32 %v1010, 1.442695
          %v1018 = vpow.pop %v1017
          %1020 = vset.pattern.permute.xlu0 0
          %1021 = vperm.xlu0 %1020, %v1003
          %v1022 = vpop.permute.xlu0 %1021
          %1025 = vset.pattern.permute.xlu0 0
          %1026 = vperm.xlu0 %1025, %v1004
          %v1027 = vpop.permute.xlu0 %1026
          %1030 = vset.pattern.permute.xlu0 0
          %1031 = vperm.xlu0 %1030, %v1005
          %v1032 = vpop.permute.xlu0 %1031
          %1035 = vset.pattern.permute.xlu0 0
          %1036 = vperm.xlu0 %1035, %v1006
          %v1037 = vpop.permute.xlu0 %1036
          %v1039 = vsub.f32 %v844, %v1022
          %v1040 = vsub.f32 %v890, %v1027
          %v1041 = vsub.f32 %v936, %v1032
          %v1042 = vsub.f32 %v982, %v1037
          %v1043 = vmul.f32 %v1039, 1.442695
          %v1044 = vpow.pop %v1043
          %v1045 = vmul.f32 %v1040, 1.442695
          %v1046 = vpow.pop %v1045
          %v1047 = vmul.f32 %v1041, 1.442695
          %v1048 = vpow.pop %v1047
          %v1049 = vmul.f32 %v1042, 1.442695
          %v1050 = vpow.pop %v1049
          %v1051 = vld [vmem:[#allocation4] sm:$0xff]
          %v1052 = vld [vmem:[#allocation4 + $0x8] sm:$0xff]
          %v1053 = vld [vmem:[#allocation4 + $0x10] sm:$0xff]
          %v1054 = vld [vmem:[#allocation4 + $0x18] sm:$0xff]
          %v1055 = vmul.f32 %v1012, %v1051
          %v1056 = vmul.f32 %v1014, %v1052
          %v1057 = vmul.f32 %v1016, %v1053
          %v1058 = vmul.f32 %v1018, %v1054
          %v1059 = vsel %vm713, %v1044, 0.0
          %1060 = vadd.xlane.f32.xlu0 %v1059
          %v1061 = vpop.xlane.xlu0 %1060
          %v1062 = vsel %vm713, %v1046, 0.0
          %1063 = vadd.xlane.f32.xlu0 %v1062
          %v1064 = vpop.xlane.xlu0 %1063
          %v1065 = vsel %vm713, %v1048, 0.0
          %1066 = vadd.xlane.f32.xlu0 %v1065
          %v1067 = vpop.xlane.xlu0 %1066
          %v1068 = vsel %vm713, %v1050, 0.0
          %1069 = vadd.xlane.f32.xlu0 %v1068
          %v1070 = vpop.xlane.xlu0 %1069
          %v1071 = vadd.f32 %v1055, %v1061
          %v1072 = vadd.f32 %v1056, %v1064
          %v1073 = vadd.f32 %v1057, %v1067
          %v1074 = vadd.f32 %v1058, %v1070
          %vm1075 = vcmask 7168
          %1076 = vst.msk [vmem:[#allocation4] sm:$0xff] %vm1075, %v1071
          %1077 = vst.msk [vmem:[#allocation4 + $0x8] sm:$0xff] %vm1075, %v1072
          %1078 = vst.msk [vmem:[#allocation4 + $0x10] sm:$0xff] %vm1075, %v1073
          %1079 = vst.msk [vmem:[#allocation4 + $0x18] sm:$0xff] %vm1075, %v1074
          %v1080 = vld [vmem:[#allocation5] sm:$0xff]
          %v1081 = vld [vmem:[#allocation5 + $0x8] sm:$0xff]
          %v1082 = vld [vmem:[#allocation5 + $0x10] sm:$0xff]
          %v1083 = vld [vmem:[#allocation5 + $0x18] sm:$0xff]
          %1085 = vset.pattern.permute.xlu0 0
          %1086 = vperm.xlu0 %1085, %v1012
          %v1087 = vpop.permute.xlu0 %1086
          %1090 = vset.pattern.permute.xlu0 0
          %1091 = vperm.xlu0 %1090, %v1014
          %v1092 = vpop.permute.xlu0 %1091
          %1095 = vset.pattern.permute.xlu0 0
          %1096 = vperm.xlu0 %1095, %v1016
          %v1097 = vpop.permute.xlu0 %1096
          %1100 = vset.pattern.permute.xlu0 0
          %1101 = vperm.xlu0 %1100, %v1018
          %v1102 = vpop.permute.xlu0 %1101
          %v1104 = vmul.f32 %v1087, %v1080
          %v1105 = vmul.f32 %v1092, %v1081
          %v1106 = vmul.f32 %v1097, %v1082
          %v1107 = vmul.f32 %v1102, %v1083
          %v1108 = vpack.c.bf16 %v1044, %v1044
          %v1109 = vpack.c.bf16 %v1046, %v1046
          %v1110 = vpack.c.bf16 %v1048, %v1048
          %v1111 = vpack.c.bf16 %v1050, %v1050
          %v1113 = vsel %vm713, %v1108, 0
          %v1116 = vsel %vm720, %v795, 0
          %1118 = vmatprep.subr.bf16.mxu0 0
          %1119 = vmatpush1.bf16.msra.mxu0 %v1116
          %1120 = vmatprep.subr.bf16.mxu0 0
          %1121 = vmatpush1.bf16.msra.mxu0 0
          %1122 = vmatprep.subr.bf16.mxu0 0
          %1123 = vmatpush1.bf16.msra.mxu0 0
          %1124 = vmatprep.subr.bf16.mxu0 0
          %1125 = vmatpush1.bf16.msra.mxu0 0
          %1126 = vmatprep.subr.bf16.mxu0 0
          %1127 = vmatpush1.bf16.msra.mxu0 0
          %1128 = vmatprep.subr.bf16.mxu0 0
          %1129 = vmatpush1.bf16.msra.mxu0 0
          %1130 = vmatprep.subr.bf16.mxu0 0
          %1131 = vmatpush1.bf16.msra.mxu0 0
          %1132 = vmatprep.subr.bf16.mxu0 0
          %1133 = vmatpush1.bf16.msra.mxu0 0
          %1134 = vmatprep.subr.bf16.mxu0 0
          %1135 = vmatpush1.bf16.msra.mxu0 0
          %1136 = vmatprep.subr.bf16.mxu0 0
          %1137 = vmatpush1.bf16.msra.mxu0 0
          %1138 = vmatprep.subr.bf16.mxu0 0
          %1139 = vmatpush1.bf16.msra.mxu0 0
          %1140 = vmatprep.subr.bf16.mxu0 0
          %1141 = vmatpush1.bf16.msra.mxu0 0
          %1142 = vmatprep.subr.bf16.mxu0 0
          %1143 = vmatpush1.bf16.msra.mxu0 0
          %1144 = vmatprep.subr.bf16.mxu0 0
          %1145 = vmatpush1.bf16.msra.mxu0 0
          %1146 = vmatprep.subr.bf16.mxu0 0
          %1147 = vmatpush1.bf16.msra.mxu0 0
          %1148 = vmatprep.subr.bf16.mxu0 0
          %1149 = vmatpush1.bf16.msra.mxu0 0
          %1150 = vmatprep.mubr.bf16.mxu0 0
          %1151 = vmatmul.mubr.bf16.gmra.mrb[0].mxu0 %v1113
          %v1152 = vpop.f32.mrb[0].mxu0
          %v1153 = vadd.f32 0.0, %v1152
          %v1154 = vpop.f32.mrb[0].mxu0
          %v1155 = vpop.f32.mrb[0].mxu0
          %v1156 = vpop.f32.mrb[0].mxu0
          %1157 = vdwg.mxu0
          %v1159 = vsel %vm713, %v1109, 0
          %v1162 = vsel %vm720, %v796, 0
          %1164 = vmatprep.subr.bf16.mxu0 0
          %1165 = vmatpush1.bf16.msra.mxu0 %v1162
          %1166 = vmatprep.subr.bf16.mxu0 0
          %1167 = vmatpush1.bf16.msra.mxu0 0
          %1168 = vmatprep.subr.bf16.mxu0 0
          %1169 = vmatpush1.bf16.msra.mxu0 0
          %1170 = vmatprep.subr.bf16.mxu0 0
          %1171 = vmatpush1.bf16.msra.mxu0 0
          %1172 = vmatprep.subr.bf16.mxu0 0
          %1173 = vmatpush1.bf16.msra.mxu0 0
          %1174 = vmatprep.subr.bf16.mxu0 0
          %1175 = vmatpush1.bf16.msra.mxu0 0
          %1176 = vmatprep.subr.bf16.mxu0 0
          %1177 = vmatpush1.bf16.msra.mxu0 0
          %1178 = vmatprep.subr.bf16.mxu0 0
          %1179 = vmatpush1.bf16.msra.mxu0 0
          %1180 = vmatprep.subr.bf16.mxu0 0
          %1181 = vmatpush1.bf16.msra.mxu0 0
          %1182 = vmatprep.subr.bf16.mxu0 0
          %1183 = vmatpush1.bf16.msra.mxu0 0
          %1184 = vmatprep.subr.bf16.mxu0 0
          %1185 = vmatpush1.bf16.msra.mxu0 0
          %1186 = vmatprep.subr.bf16.mxu0 0
          %1187 = vmatpush1.bf16.msra.mxu0 0
          %1188 = vmatprep.subr.bf16.mxu0 0
          %1189 = vmatpush1.bf16.msra.mxu0 0
          %1190 = vmatprep.subr.bf16.mxu0 0
          %1191 = vmatpush1.bf16.msra.mxu0 0
          %1192 = vmatprep.subr.bf16.mxu0 0
          %1193 = vmatpush1.bf16.msra.mxu0 0
          %1194 = vmatprep.subr.bf16.mxu0 0
          %1195 = vmatpush1.bf16.msra.mxu0 0
          %1196 = vmatprep.mubr.bf16.mxu0 0
          %1197 = vmatmul.mubr.bf16.gmra.mrb[0].mxu0 %v1159
          %v1198 = vpop.f32.mrb[0].mxu0
          %v1199 = vadd.f32 0.0, %v1198
          %v1200 = vpop.f32.mrb[0].mxu0
          %v1201 = vpop.f32.mrb[0].mxu0
          %v1202 = vpop.f32.mrb[0].mxu0
          %1203 = vdwg.mxu0
          %v1205 = vsel %vm713, %v1110, 0
          %v1208 = vsel %vm720, %v797, 0
          %1210 = vmatprep.subr.bf16.mxu0 0
          %1211 = vmatpush1.bf16.msra.mxu0 %v1208
          %1212 = vmatprep.subr.bf16.mxu0 0
          %1213 = vmatpush1.bf16.msra.mxu0 0
          %1214 = vmatprep.subr.bf16.mxu0 0
          %1215 = vmatpush1.bf16.msra.mxu0 0
          %1216 = vmatprep.subr.bf16.mxu0 0
          %1217 = vmatpush1.bf16.msra.mxu0 0
          %1218 = vmatprep.subr.bf16.mxu0 0
          %1219 = vmatpush1.bf16.msra.mxu0 0
          %1220 = vmatprep.subr.bf16.mxu0 0
          %1221 = vmatpush1.bf16.msra.mxu0 0
          %1222 = vmatprep.subr.bf16.mxu0 0
          %1223 = vmatpush1.bf16.msra.mxu0 0
          %1224 = vmatprep.subr.bf16.mxu0 0
          %1225 = vmatpush1.bf16.msra.mxu0 0
          %1226 = vmatprep.subr.bf16.mxu0 0
          %1227 = vmatpush1.bf16.msra.mxu0 0
          %1228 = vmatprep.subr.bf16.mxu0 0
          %1229 = vmatpush1.bf16.msra.mxu0 0
          %1230 = vmatprep.subr.bf16.mxu0 0
          %1231 = vmatpush1.bf16.msra.mxu0 0
          %1232 = vmatprep.subr.bf16.mxu0 0
          %1233 = vmatpush1.bf16.msra.mxu0 0
          %1234 = vmatprep.subr.bf16.mxu0 0
          %1235 = vmatpush1.bf16.msra.mxu0 0
          %1236 = vmatprep.subr.bf16.mxu0 0
          %1237 = vmatpush1.bf16.msra.mxu0 0
          %1238 = vmatprep.subr.bf16.mxu0 0
          %1239 = vmatpush1.bf16.msra.mxu0 0
          %1240 = vmatprep.subr.bf16.mxu0 0
          %1241 = vmatpush1.bf16.msra.mxu0 0
          %1242 = vmatprep.mubr.bf16.mxu0 0
          %1243 = vmatmul.mubr.bf16.gmra.mrb[0].mxu0 %v1205
          %v1244 = vpop.f32.mrb[0].mxu0
          %v1245 = vadd.f32 0.0, %v1244
          %v1246 = vpop.f32.mrb[0].mxu0
          %v1247 = vpop.f32.mrb[0].mxu0
          %v1248 = vpop.f32.mrb[0].mxu0
          %1249 = vdwg.mxu0
          %v1251 = vsel %vm713, %v1111, 0
          %v1254 = vsel %vm720, %v798, 0
          %1256 = vmatprep.subr.bf16.mxu0 0
          %1257 = vmatpush1.bf16.msra.mxu0 %v1254
          %1258 = vmatprep.subr.bf16.mxu0 0
          %1259 = vmatpush1.bf16.msra.mxu0 0
          %1260 = vmatprep.subr.bf16.mxu0 0
          %1261 = vmatpush1.bf16.msra.mxu0 0
          %1262 = vmatprep.subr.bf16.mxu0 0
          %1263 = vmatpush1.bf16.msra.mxu0 0
          %1264 = vmatprep.subr.bf16.mxu0 0
          %1265 = vmatpush1.bf16.msra.mxu0 0
          %1266 = vmatprep.subr.bf16.mxu0 0
          %1267 = vmatpush1.bf16.msra.mxu0 0
          %1268 = vmatprep.subr.bf16.mxu0 0
          %1269 = vmatpush1.bf16.msra.mxu0 0
          %1270 = vmatprep.subr.bf16.mxu0 0
          %1271 = vmatpush1.bf16.msra.mxu0 0
          %1272 = vmatprep.subr.bf16.mxu0 0
          %1273 = vmatpush1.bf16.msra.mxu0 0
          %1274 = vmatprep.subr.bf16.mxu0 0
          %1275 = vmatpush1.bf16.msra.mxu0 0
          %1276 = vmatprep.subr.bf16.mxu0 0
          %1277 = vmatpush1.bf16.msra.mxu0 0
          %1278 = vmatprep.subr.bf16.mxu0 0
          %1279 = vmatpush1.bf16.msra.mxu0 0
          %1280 = vmatprep.subr.bf16.mxu0 0
          %1281 = vmatpush1.bf16.msra.mxu0 0
          %1282 = vmatprep.subr.bf16.mxu0 0
          %1283 = vmatpush1.bf16.msra.mxu0 0
          %1284 = vmatprep.subr.bf16.mxu0 0
          %1285 = vmatpush1.bf16.msra.mxu0 0
          %1286 = vmatprep.subr.bf16.mxu0 0
          %1287 = vmatpush1.bf16.msra.mxu0 0
          %1288 = vmatprep.mubr.bf16.mxu0 0
          %1289 = vmatmul.mubr.bf16.gmra.mrb[0].mxu0 %v1251
          %v1290 = vpop.f32.mrb[0].mxu0
          %v1291 = vadd.f32 0.0, %v1290
          %v1292 = vpop.f32.mrb[0].mxu0
          %v1293 = vpop.f32.mrb[0].mxu0
          %v1294 = vpop.f32.mrb[0].mxu0
          %1295 = vdwg.mxu0
          %v1296 = vadd.f32 %v1104, %v1153
          %v1297 = vadd.f32 %v1105, %v1199
          %v1298 = vadd.f32 %v1106, %v1245
          %v1299 = vadd.f32 %v1107, %v1291
          %1300 = vst.msk [vmem:[#allocation5] sm:$0xff] %vm713, %v1296
          %1301 = vst.msk [vmem:[#allocation5 + $0x8] sm:$0xff] %vm713, %v1297
          %1302 = vst.msk [vmem:[#allocation5 + $0x10] sm:$0xff] %vm713, %v1298
          %1303 = vst.msk [vmem:[#allocation5 + $0x18] sm:$0xff] %vm713, %v1299
          %1304 = vst.msk [vmem:[#allocation3] sm:$0xff] %vm1075, %v1003
          %1305 = vst.msk [vmem:[#allocation3 + $0x8] sm:$0xff] %vm1075, %v1004
          %1306 = vst.msk [vmem:[#allocation3 + $0x10] sm:$0xff] %vm1075, %v1005
          %1307 = vst.msk [vmem:[#allocation3 + $0x18] sm:$0xff] %vm1075, %v1006
        $region80: #{tpu_custom_call.1} parent=51 // pred_fallthru
          _
        %p1308 = pneg %p693
        %p1309 = pnand %p688, %p1308
        %p1310 = pneg %p1309
        // Predicated region
        $region81: #{tpu_custom_call.1} parent=51 // pred_check
          _
        $region82: #{tpu_custom_call.1} parent=51 // pred_check_branch
          %1312 = sbr.rel (%p1309) target = $region84
        $region83: #{tpu_custom_call.1} parent=51 // pred_region
          %v1313 = vld [vmem:[%s467] sm:$0xf]
          %v1314 = vld [vmem:[%s467 + $0x4] sm:$0xf]
          %v1315 = vld [vmem:[%s467 + $0x8] sm:$0xf]
          %v1316 = vld [vmem:[%s467 + $0xc] sm:$0xf]
          %v1317 = vld [vmem:[%s7] sm:$0xf]
          %v1322 = vunpack.c.l.b16 %v1313
          %v1323 = vunpack.c.l.b16 %v1314
          %v1324 = vunpack.c.l.b16 %v1315
          %v1325 = vunpack.c.l.b16 %v1316
          %v1326 = vpack.c.b16 %v1323, %v1322
          %v1327 = vpack.c.b16 %v1325, %v1324
          %vm1328 = vcmask 64512
          %v1330 = vsel %vm1328, %v1326, 0
          %v1333 = vsel %vm1328, %v1327, 0
          %vm1335 = vcmask 1043456
          %v1337 = vsel %vm1335, %v1317, 0
          %1339 = vmatprep.subr.bf16.mxu0 0
          %1340 = vmatpush1.bf16.msra.mxu0 %v1337
          %1341 = vmatprep.subr.bf16.mxu0 0
          %1342 = vmatpush1.bf16.msra.mxu0 0
          %1343 = vmatprep.subr.bf16.mxu0 0
          %1344 = vmatpush1.bf16.msra.mxu0 0
          %1345 = vmatprep.subr.bf16.mxu0 0
          %1346 = vmatpush1.bf16.msra.mxu0 0
          %1347 = vmatprep.subr.bf16.mxu0 0
          %1348 = vmatpush1.bf16.msra.mxu0 0
          %1349 = vmatprep.subr.bf16.mxu0 0
          %1350 = vmatpush1.bf16.msra.mxu0 0
          %1351 = vmatprep.subr.bf16.mxu0 0
          %1352 = vmatpush1.bf16.msra.mxu0 0
          %1353 = vmatprep.subr.bf16.mxu0 0
          %1354 = vmatpush1.bf16.msra.mxu0 0
          %1355 = vmatprep.subr.bf16.mxu0 0
          %1356 = vmatpush1.bf16.msra.mxu0 0
          %1357 = vmatprep.subr.bf16.mxu0 0
          %1358 = vmatpush1.bf16.msra.mxu0 0
          %1359 = vmatprep.subr.bf16.mxu0 0
          %1360 = vmatpush1.bf16.msra.mxu0 0
          %1361 = vmatprep.subr.bf16.mxu0 0
          %1362 = vmatpush1.bf16.msra.mxu0 0
          %1363 = vmatprep.subr.bf16.mxu0 0
          %1364 = vmatpush1.bf16.msra.mxu0 0
          %1365 = vmatprep.subr.bf16.mxu0 0
          %1366 = vmatpush1.bf16.msra.mxu0 0
          %1367 = vmatprep.subr.bf16.mxu0 0
          %1368 = vmatpush1.bf16.msra.mxu0 0
          %1369 = vmatprep.subr.bf16.mxu0 0
          %1370 = vmatpush1.bf16.msra.mxu0 0
          %1371 = vmatprep.mubr.bf16.mxu0 0
          %1372 = vmatmul.mubr.bf16.gmra.mrb[0].mxu0 %v1330
          %v1373 = vpop.f32.mrb[0].mxu0
          %v1374 = vadd.f32 0.0, %v1373
          %v1375 = vpop.f32.mrb[0].mxu0
          %v1376 = vpop.f32.mrb[0].mxu0
          %v1377 = vadd.f32 0.0, %v1376
          %v1378 = vpop.f32.mrb[0].mxu0
          %1379 = vmatprep.mubr.bf16.mxu0 0
          %1380 = vmatmul.mubr.bf16.gmra.mrb[0].mxu0 %v1333
          %v1381 = vpop.f32.mrb[0].mxu0
          %v1382 = vadd.f32 0.0, %v1381
          %v1383 = vpop.f32.mrb[0].mxu0
          %v1384 = vpop.f32.mrb[0].mxu0
          %v1385 = vadd.f32 0.0, %v1384
          %v1386 = vpop.f32.mrb[0].mxu0
          %1387 = vdwg.mxu0
          %v1388 = vunpack.c.l.bf16 %v1313
          %v1389 = vunpack.c.l.bf16 %v1314
          %v1390 = vunpack.c.l.bf16 %v1315
          %v1391 = vunpack.c.l.bf16 %v1316
          %v1392 = vld [vmem:[%s554] sm:$0xff]
          %v1393 = vmul.f32 %v1388, %v1392
          %v1394 = vmul.f32 %v1389, %v1392
          %v1395 = vmul.f32 %v1390, %v1392
          %v1396 = vmul.f32 %v1391, %v1392
          %v1397 = vld [vmem:[#allocation14] sm:$0xff]
          %v1398 = vmul.f32 %v1374, %v1397
          %v1399 = vmul.f32 %v1377, %v1397
          %v1400 = vmul.f32 %v1382, %v1397
          %v1401 = vmul.f32 %v1385, %v1397
          %v1402 = vadd.f32 %v1393, %v1398
          %v1403 = vadd.f32 %v1394, %v1399
          %v1404 = vadd.f32 %v1395, %v1400
          %v1405 = vadd.f32 %v1396, %v1401
          %v1406 = vpack.c.bf16 %v1402, %v1402
          %v1407 = vpack.c.bf16 %v1403, %v1403
          %v1408 = vpack.c.bf16 %v1404, %v1404
          %v1409 = vpack.c.bf16 %v1405, %v1405
          %v1410 = vld [vmem:[%s476] sm:$0xf]
          %v1411 = vld [vmem:[%s476 + $0x4] sm:$0xf]
          %v1412 = vld [vmem:[%s476 + $0x8] sm:$0xf]
          %v1413 = vld [vmem:[%s476 + $0xc] sm:$0xf]
          %v1414 = vld [vmem:[#allocation2] sm:$0xf]
          %v1415 = vld [vmem:[#allocation2 + $0x4] sm:$0xf]
          %v1416 = vld [vmem:[#allocation2 + $0x8] sm:$0xf]
          %v1417 = vld [vmem:[#allocation2 + $0xc] sm:$0xf]
          %v1419 = vsel %vm1328, %v1414, 0
          %v1422 = vsel %vm1328, %v1406, 0
          %1424 = vmatprep.subr.bf16.mxu0 0
          %1425 = vmatpush1.bf16.xpose.msra.mxu0 %v1422
          %1426 = vmatprep.subr.bf16.mxu0 0
          %1427 = vmatpush1.bf16.xpose.msra.mxu0 0
          %1428 = vmatprep.subr.bf16.mxu0 0
          %1429 = vmatpush1.bf16.xpose.msra.mxu0 0
          %1430 = vmatprep.subr.bf16.mxu0 0
          %1431 = vmatpush1.bf16.xpose.msra.mxu0 0
          %1432 = vmatprep.subr.bf16.mxu0 0
          %1433 = vmatpush1.bf16.xpose.msra.mxu0 0
          %1434 = vmatprep.subr.bf16.mxu0 0
          %1435 = vmatpush1.bf16.xpose.msra.mxu0 0
          %1436 = vmatprep.subr.bf16.mxu0 0
          %1437 = vmatpush1.bf16.xpose.msra.mxu0 0
          %1438 = vmatprep.subr.bf16.mxu0 0
          %1439 = vmatpush1.bf16.xpose.msra.mxu0 0
          %1440 = vmatprep.subr.bf16.mxu0 0
          %1441 = vmatpush1.bf16.xpose.msra.mxu0 0
          %1442 = vmatprep.subr.bf16.mxu0 0
          %1443 = vmatpush1.bf16.xpose.msra.mxu0 0
          %1444 = vmatprep.subr.bf16.mxu0 0
          %1445 = vmatpush1.bf16.xpose.msra.mxu0 0
          %1446 = vmatprep.subr.bf16.mxu0 0
          %1447 = vmatpush1.bf16.xpose.msra.mxu0 0
          %1448 = vmatprep.subr.bf16.mxu0 0
          %1449 = vmatpush1.bf16.xpose.msra.mxu0 0
          %1450 = vmatprep.subr.bf16.mxu0 0
          %1451 = vmatpush1.bf16.xpose.msra.mxu0 0
          %1452 = vmatprep.subr.bf16.mxu0 0
          %1453 = vmatpush1.bf16.xpose.msra.mxu0 0
          %1454 = vmatprep.subr.bf16.mxu0 0
          %1455 = vmatpush1.bf16.xpose.msra.mxu0 0
          %1456 = vmatprep.mubr.bf16.mxu0 0
          %1457 = vmatmul.mubr.bf16.gmra.mrb[0].mxu0 %v1419
          %v1458 = vpop.f32.mrb[0].mxu0
          %v1459 = vadd.f32 0.0, %v1458
          %v1460 = vpop.f32.mrb[0].mxu0
          %v1461 = vpop.f32.mrb[0].mxu0
          %v1462 = vpop.f32.mrb[0].mxu0
          %1463 = vdwg.mxu0
          %v1465 = vsel %vm1328, %v1415, 0
          %v1468 = vsel %vm1328, %v1407, 0
          %1470 = vmatprep.subr.bf16.mxu0 0
          %1471 = vmatpush1.bf16.xpose.msra.mxu0 %v1468
          %1472 = vmatprep.subr.bf16.mxu0 0
          %1473 = vmatpush1.bf16.xpose.msra.mxu0 0
          %1474 = vmatprep.subr.bf16.mxu0 0
          %1475 = vmatpush1.bf16.xpose.msra.mxu0 0
          %1476 = vmatprep.subr.bf16.mxu0 0
          %1477 = vmatpush1.bf16.xpose.msra.mxu0 0
          %1478 = vmatprep.subr.bf16.mxu0 0
          %1479 = vmatpush1.bf16.xpose.msra.mxu0 0
          %1480 = vmatprep.subr.bf16.mxu0 0
          %1481 = vmatpush1.bf16.xpose.msra.mxu0 0
          %1482 = vmatprep.subr.bf16.mxu0 0
          %1483 = vmatpush1.bf16.xpose.msra.mxu0 0
          %1484 = vmatprep.subr.bf16.mxu0 0
          %1485 = vmatpush1.bf16.xpose.msra.mxu0 0
          %1486 = vmatprep.subr.bf16.mxu0 0
          %1487 = vmatpush1.bf16.xpose.msra.mxu0 0
          %1488 = vmatprep.subr.bf16.mxu0 0
          %1489 = vmatpush1.bf16.xpose.msra.mxu0 0
          %1490 = vmatprep.subr.bf16.mxu0 0
          %1491 = vmatpush1.bf16.xpose.msra.mxu0 0
          %1492 = vmatprep.subr.bf16.mxu0 0
          %1493 = vmatpush1.bf16.xpose.msra.mxu0 0
          %1494 = vmatprep.subr.bf16.mxu0 0
          %1495 = vmatpush1.bf16.xpose.msra.mxu0 0
          %1496 = vmatprep.subr.bf16.mxu0 0
          %1497 = vmatpush1.bf16.xpose.msra.mxu0 0
          %1498 = vmatprep.subr.bf16.mxu0 0
          %1499 = vmatpush1.bf16.xpose.msra.mxu0 0
          %1500 = vmatprep.subr.bf16.mxu0 0
          %1501 = vmatpush1.bf16.xpose.msra.mxu0 0
          %1502 = vmatprep.mubr.bf16.mxu0 0
          %1503 = vmatmul.mubr.bf16.gmra.mrb[0].mxu0 %v1465
          %v1504 = vpop.f32.mrb[0].mxu0
          %v1505 = vadd.f32 0.0, %v1504
          %v1506 = vpop.f32.mrb[0].mxu0
          %v1507 = vpop.f32.mrb[0].mxu0
          %v1508 = vpop.f32.mrb[0].mxu0
          %1509 = vdwg.mxu0
          %v1511 = vsel %vm1328, %v1416, 0
          %v1514 = vsel %vm1328, %v1408, 0
          %1516 = vmatprep.subr.bf16.mxu0 0
          %1517 = vmatpush1.bf16.xpose.msra.mxu0 %v1514
          %1518 = vmatprep.subr.bf16.mxu0 0
          %1519 = vmatpush1.bf16.xpose.msra.mxu0 0
          %1520 = vmatprep.subr.bf16.mxu0 0
          %1521 = vmatpush1.bf16.xpose.msra.mxu0 0
          %1522 = vmatprep.subr.bf16.mxu0 0
          %1523 = vmatpush1.bf16.xpose.msra.mxu0 0
          %1524 = vmatprep.subr.bf16.mxu0 0
          %1525 = vmatpush1.bf16.xpose.msra.mxu0 0
          %1526 = vmatprep.subr.bf16.mxu0 0
          %1527 = vmatpush1.bf16.xpose.msra.mxu0 0
          %1528 = vmatprep.subr.bf16.mxu0 0
          %1529 = vmatpush1.bf16.xpose.msra.mxu0 0
          %1530 = vmatprep.subr.bf16.mxu0 0
          %1531 = vmatpush1.bf16.xpose.msra.mxu0 0
          %1532 = vmatprep.subr.bf16.mxu0 0
          %1533 = vmatpush1.bf16.xpose.msra.mxu0 0
          %1534 = vmatprep.subr.bf16.mxu0 0
          %1535 = vmatpush1.bf16.xpose.msra.mxu0 0
          %1536 = vmatprep.subr.bf16.mxu0 0
          %1537 = vmatpush1.bf16.xpose.msra.mxu0 0
          %1538 = vmatprep.subr.bf16.mxu0 0
          %1539 = vmatpush1.bf16.xpose.msra.mxu0 0
          %1540 = vmatprep.subr.bf16.mxu0 0
          %1541 = vmatpush1.bf16.xpose.msra.mxu0 0
          %1542 = vmatprep.subr.bf16.mxu0 0
          %1543 = vmatpush1.bf16.xpose.msra.mxu0 0
          %1544 = vmatprep.subr.bf16.mxu0 0
          %1545 = vmatpush1.bf16.xpose.msra.mxu0 0
          %1546 = vmatprep.subr.bf16.mxu0 0
          %1547 = vmatpush1.bf16.xpose.msra.mxu0 0
          %1548 = vmatprep.mubr.bf16.mxu0 0
          %1549 = vmatmul.mubr.bf16.gmra.mrb[0].mxu0 %v1511
          %v1550 = vpop.f32.mrb[0].mxu0
          %v1551 = vadd.f32 0.0, %v1550
          %v1552 = vpop.f32.mrb[0].mxu0
          %v1553 = vpop.f32.mrb[0].mxu0
          %v1554 = vpop.f32.mrb[0].mxu0
          %1555 = vdwg.mxu0
          %v1557 = vsel %vm1328, %v1417, 0
          %v1560 = vsel %vm1328, %v1409, 0
          %1562 = vmatprep.subr.bf16.mxu0 0
          %1563 = vmatpush1.bf16.xpose.msra.mxu0 %v1560
          %1564 = vmatprep.subr.bf16.mxu0 0
          %1565 = vmatpush1.bf16.xpose.msra.mxu0 0
          %1566 = vmatprep.subr.bf16.mxu0 0
          %1567 = vmatpush1.bf16.xpose.msra.mxu0 0
          %1568 = vmatprep.subr.bf16.mxu0 0
          %1569 = vmatpush1.bf16.xpose.msra.mxu0 0
          %1570 = vmatprep.subr.bf16.mxu0 0
          %1571 = vmatpush1.bf16.xpose.msra.mxu0 0
          %1572 = vmatprep.subr.bf16.mxu0 0
          %1573 = vmatpush1.bf16.xpose.msra.mxu0 0
          %1574 = vmatprep.subr.bf16.mxu0 0
          %1575 = vmatpush1.bf16.xpose.msra.mxu0 0
          %1576 = vmatprep.subr.bf16.mxu0 0
          %1577 = vmatpush1.bf16.xpose.msra.mxu0 0
          %1578 = vmatprep.subr.bf16.mxu0 0
          %1579 = vmatpush1.bf16.xpose.msra.mxu0 0
          %1580 = vmatprep.subr.bf16.mxu0 0
          %1581 = vmatpush1.bf16.xpose.msra.mxu0 0
          %1582 = vmatprep.subr.bf16.mxu0 0
          %1583 = vmatpush1.bf16.xpose.msra.mxu0 0
          %1584 = vmatprep.subr.bf16.mxu0 0
          %1585 = vmatpush1.bf16.xpose.msra.mxu0 0
          %1586 = vmatprep.subr.bf16.mxu0 0
          %1587 = vmatpush1.bf16.xpose.msra.mxu0 0
          %1588 = vmatprep.subr.bf16.mxu0 0
          %1589 = vmatpush1.bf16.xpose.msra.mxu0 0
          %1590 = vmatprep.subr.bf16.mxu0 0
          %1591 = vmatpush1.bf16.xpose.msra.mxu0 0
          %1592 = vmatprep.subr.bf16.mxu0 0
          %1593 = vmatpush1.bf16.xpose.msra.mxu0 0
          %1594 = vmatprep.mubr.bf16.mxu0 0
          %1595 = vmatmul.mubr.bf16.gmra.mrb[0].mxu0 %v1557
          %v1596 = vpop.f32.mrb[0].mxu0
          %v1597 = vadd.f32 0.0, %v1596
          %v1598 = vpop.f32.mrb[0].mxu0
          %v1599 = vpop.f32.mrb[0].mxu0
          %v1600 = vpop.f32.mrb[0].mxu0
          %1601 = vdwg.mxu0
          %v1602 = vlaneseq
          %v1603 = vshrl.u32 %v1602, 7
          %v1604 = vlaneseq
          %v1605 = vand.u32 %v1604, 127
          %v1606 = vsub.s32 %v1603, %v1605
          %v1607 = vstv %s687
          %v1608 = vadd.s32 %v1606, %v1607
          %vm1609 = vcmp.ge.s32.totalorder %v1608, 0
          %vm1610 = vcmp.le.s32.totalorder %v1608, 4
          %vm1611 = vmand %vm1609, %vm1610
          %v1612 = vsel %vm1611, 1, 0
          %vm1613 = vcmp.eq.s32.totalorder %v1612, 1
          %v1614 = vsel %vm1613, %v1459, -inf
          %v1615 = vsel %vm1613, %v1505, -inf
          %v1616 = vsel %vm1613, %v1551, -inf
          %v1617 = vsel %vm1613, %v1597, -inf
          %v1618 = vld [vmem:[#allocation3] sm:$0xff]
          %v1619 = vld [vmem:[#allocation3 + $0x8] sm:$0xff]
          %v1620 = vld [vmem:[#allocation3 + $0x10] sm:$0xff]
          %v1621 = vld [vmem:[#allocation3 + $0x18] sm:$0xff]
          %v1622 = vsel %vm1328, %v1614, -inf
          %1623 = vmax.xlane.f32.xlu0 %v1622
          %v1624 = vpop.xlane.xlu0 %1623
          %v1625 = vsel %vm1328, %v1615, -inf
          %1626 = vmax.xlane.f32.xlu0 %v1625
          %v1627 = vpop.xlane.xlu0 %1626
          %v1628 = vsel %vm1328, %v1616, -inf
          %1629 = vmax.xlane.f32.xlu0 %v1628
          %v1630 = vpop.xlane.xlu0 %1629
          %v1631 = vsel %vm1328, %v1617, -inf
          %1632 = vmax.xlane.f32.xlu0 %v1631
          %v1633 = vpop.xlane.xlu0 %1632
          %v1634 = vmax.f32 %v1618, %v1624
          %v1635 = vmax.f32 %v1619, %v1627
          %v1636 = vmax.f32 %v1620, %v1630
          %v1637 = vmax.f32 %v1621, %v1633
          %v1638 = vsub.f32 %v1618, %v1634
          %v1639 = vsub.f32 %v1619, %v1635
          %v1640 = vsub.f32 %v1620, %v1636
          %v1641 = vsub.f32 %v1621, %v1637
          %v1642 = vmul.f32 %v1638, 1.442695
          %v1643 = vpow.pop %v1642
          %v1644 = vmul.f32 %v1639, 1.442695
          %v1645 = vpow.pop %v1644
          %v1646 = vmul.f32 %v1640, 1.442695
          %v1647 = vpow.pop %v1646
          %v1648 = vmul.f32 %v1641, 1.442695
          %v1649 = vpow.pop %v1648
          %1651 = vset.pattern.permute.xlu0 0
          %1652 = vperm.xlu0 %1651, %v1634
          %v1653 = vpop.permute.xlu0 %1652
          %1656 = vset.pattern.permute.xlu0 0
          %1657 = vperm.xlu0 %1656, %v1635
          %v1658 = vpop.permute.xlu0 %1657
          %1661 = vset.pattern.permute.xlu0 0
          %1662 = vperm.xlu0 %1661, %v1636
          %v1663 = vpop.permute.xlu0 %1662
          %1666 = vset.pattern.permute.xlu0 0
          %1667 = vperm.xlu0 %1666, %v1637
          %v1668 = vpop.permute.xlu0 %1667
          %v1670 = vsub.f32 %v1614, %v1653
          %v1671 = vsub.f32 %v1615, %v1658
          %v1672 = vsub.f32 %v1616, %v1663
          %v1673 = vsub.f32 %v1617, %v1668
          %v1674 = vmul.f32 %v1670, 1.442695
          %v1675 = vpow.pop %v1674
          %v1676 = vmul.f32 %v1671, 1.442695
          %v1677 = vpow.pop %v1676
          %v1678 = vmul.f32 %v1672, 1.442695
          %v1679 = vpow.pop %v1678
          %v1680 = vmul.f32 %v1673, 1.442695
          %v1681 = vpow.pop %v1680
          %v1682 = vld [vmem:[#allocation4] sm:$0xff]
          %v1683 = vld [vmem:[#allocation4 + $0x8] sm:$0xff]
          %v1684 = vld [vmem:[#allocation4 + $0x10] sm:$0xff]
          %v1685 = vld [vmem:[#allocation4 + $0x18] sm:$0xff]
          %v1686 = vmul.f32 %v1643, %v1682
          %v1687 = vmul.f32 %v1645, %v1683
          %v1688 = vmul.f32 %v1647, %v1684
          %v1689 = vmul.f32 %v1649, %v1685
          %v1690 = vsel %vm1328, %v1675, 0.0
          %1691 = vadd.xlane.f32.xlu0 %v1690
          %v1692 = vpop.xlane.xlu0 %1691
          %v1693 = vsel %vm1328, %v1677, 0.0
          %1694 = vadd.xlane.f32.xlu0 %v1693
          %v1695 = vpop.xlane.xlu0 %1694
          %v1696 = vsel %vm1328, %v1679, 0.0
          %1697 = vadd.xlane.f32.xlu0 %v1696
          %v1698 = vpop.xlane.xlu0 %1697
          %v1699 = vsel %vm1328, %v1681, 0.0
          %1700 = vadd.xlane.f32.xlu0 %v1699
          %v1701 = vpop.xlane.xlu0 %1700
          %v1702 = vadd.f32 %v1686, %v1692
          %v1703 = vadd.f32 %v1687, %v1695
          %v1704 = vadd.f32 %v1688, %v1698
          %v1705 = vadd.f32 %v1689, %v1701
          %vm1706 = vcmask 7168
          %1707 = vst.msk [vmem:[#allocation4] sm:$0xff] %vm1706, %v1702
          %1708 = vst.msk [vmem:[#allocation4 + $0x8] sm:$0xff] %vm1706, %v1703
          %1709 = vst.msk [vmem:[#allocation4 + $0x10] sm:$0xff] %vm1706, %v1704
          %1710 = vst.msk [vmem:[#allocation4 + $0x18] sm:$0xff] %vm1706, %v1705
          %v1711 = vld [vmem:[#allocation5] sm:$0xff]
          %v1712 = vld [vmem:[#allocation5 + $0x8] sm:$0xff]
          %v1713 = vld [vmem:[#allocation5 + $0x10] sm:$0xff]
          %v1714 = vld [vmem:[#allocation5 + $0x18] sm:$0xff]
          %1716 = vset.pattern.permute.xlu0 0
          %1717 = vperm.xlu0 %1716, %v1643
          %v1718 = vpop.permute.xlu0 %1717
          %1721 = vset.pattern.permute.xlu0 0
          %1722 = vperm.xlu0 %1721, %v1645
          %v1723 = vpop.permute.xlu0 %1722
          %1726 = vset.pattern.permute.xlu0 0
          %1727 = vperm.xlu0 %1726, %v1647
          %v1728 = vpop.permute.xlu0 %1727
          %1731 = vset.pattern.permute.xlu0 0
          %1732 = vperm.xlu0 %1731, %v1649
          %v1733 = vpop.permute.xlu0 %1732
          %v1735 = vmul.f32 %v1718, %v1711
          %v1736 = vmul.f32 %v1723, %v1712
          %v1737 = vmul.f32 %v1728, %v1713
          %v1738 = vmul.f32 %v1733, %v1714
          %v1739 = vpack.c.bf16 %v1675, %v1675
          %v1740 = vpack.c.bf16 %v1677, %v1677
          %v1741 = vpack.c.bf16 %v1679, %v1679
          %v1742 = vpack.c.bf16 %v1681, %v1681
          %v1744 = vsel %vm1328, %v1739, 0
          %v1747 = vsel %vm1335, %v1410, 0
          %1749 = vmatprep.subr.bf16.mxu0 0
          %1750 = vmatpush1.bf16.msra.mxu0 %v1747
          %1751 = vmatprep.subr.bf16.mxu0 0
          %1752 = vmatpush1.bf16.msra.mxu0 0
          %1753 = vmatprep.subr.bf16.mxu0 0
          %1754 = vmatpush1.bf16.msra.mxu0 0
          %1755 = vmatprep.subr.bf16.mxu0 0
          %1756 = vmatpush1.bf16.msra.mxu0 0
          %1757 = vmatprep.subr.bf16.mxu0 0
          %1758 = vmatpush1.bf16.msra.mxu0 0
          %1759 = vmatprep.subr.bf16.mxu0 0
          %1760 = vmatpush1.bf16.msra.mxu0 0
          %1761 = vmatprep.subr.bf16.mxu0 0
          %1762 = vmatpush1.bf16.msra.mxu0 0
          %1763 = vmatprep.subr.bf16.mxu0 0
          %1764 = vmatpush1.bf16.msra.mxu0 0
          %1765 = vmatprep.subr.bf16.mxu0 0
          %1766 = vmatpush1.bf16.msra.mxu0 0
          %1767 = vmatprep.subr.bf16.mxu0 0
          %1768 = vmatpush1.bf16.msra.mxu0 0
          %1769 = vmatprep.subr.bf16.mxu0 0
          %1770 = vmatpush1.bf16.msra.mxu0 0
          %1771 = vmatprep.subr.bf16.mxu0 0
          %1772 = vmatpush1.bf16.msra.mxu0 0
          %1773 = vmatprep.subr.bf16.mxu0 0
          %1774 = vmatpush1.bf16.msra.mxu0 0
          %1775 = vmatprep.subr.bf16.mxu0 0
          %1776 = vmatpush1.bf16.msra.mxu0 0
          %1777 = vmatprep.subr.bf16.mxu0 0
          %1778 = vmatpush1.bf16.msra.mxu0 0
          %1779 = vmatprep.subr.bf16.mxu0 0
          %1780 = vmatpush1.bf16.msra.mxu0 0
          %1781 = vmatprep.mubr.bf16.mxu0 0
          %1782 = vmatmul.mubr.bf16.gmra.mrb[0].mxu0 %v1744
          %v1783 = vpop.f32.mrb[0].mxu0
          %v1784 = vadd.f32 0.0, %v1783
          %v1785 = vpop.f32.mrb[0].mxu0
          %v1786 = vpop.f32.mrb[0].mxu0
          %v1787 = vpop.f32.mrb[0].mxu0
          %1788 = vdwg.mxu0
          %v1790 = vsel %vm1328, %v1740, 0
          %v1793 = vsel %vm1335, %v1411, 0
          %1795 = vmatprep.subr.bf16.mxu0 0
          %1796 = vmatpush1.bf16.msra.mxu0 %v1793
          %1797 = vmatprep.subr.bf16.mxu0 0
          %1798 = vmatpush1.bf16.msra.mxu0 0
          %1799 = vmatprep.subr.bf16.mxu0 0
          %1800 = vmatpush1.bf16.msra.mxu0 0
          %1801 = vmatprep.subr.bf16.mxu0 0
          %1802 = vmatpush1.bf16.msra.mxu0 0
          %1803 = vmatprep.subr.bf16.mxu0 0
          %1804 = vmatpush1.bf16.msra.mxu0 0
          %1805 = vmatprep.subr.bf16.mxu0 0
          %1806 = vmatpush1.bf16.msra.mxu0 0
          %1807 = vmatprep.subr.bf16.mxu0 0
          %1808 = vmatpush1.bf16.msra.mxu0 0
          %1809 = vmatprep.subr.bf16.mxu0 0
          %1810 = vmatpush1.bf16.msra.mxu0 0
          %1811 = vmatprep.subr.bf16.mxu0 0
          %1812 = vmatpush1.bf16.msra.mxu0 0
          %1813 = vmatprep.subr.bf16.mxu0 0
          %1814 = vmatpush1.bf16.msra.mxu0 0
          %1815 = vmatprep.subr.bf16.mxu0 0
          %1816 = vmatpush1.bf16.msra.mxu0 0
          %1817 = vmatprep.subr.bf16.mxu0 0
          %1818 = vmatpush1.bf16.msra.mxu0 0
          %1819 = vmatprep.subr.bf16.mxu0 0
          %1820 = vmatpush1.bf16.msra.mxu0 0
          %1821 = vmatprep.subr.bf16.mxu0 0
          %1822 = vmatpush1.bf16.msra.mxu0 0
          %1823 = vmatprep.subr.bf16.mxu0 0
          %1824 = vmatpush1.bf16.msra.mxu0 0
          %1825 = vmatprep.subr.bf16.mxu0 0
          %1826 = vmatpush1.bf16.msra.mxu0 0
          %1827 = vmatprep.mubr.bf16.mxu0 0
          %1828 = vmatmul.mubr.bf16.gmra.mrb[0].mxu0 %v1790
          %v1829 = vpop.f32.mrb[0].mxu0
          %v1830 = vadd.f32 0.0, %v1829
          %v1831 = vpop.f32.mrb[0].mxu0
          %v1832 = vpop.f32.mrb[0].mxu0
          %v1833 = vpop.f32.mrb[0].mxu0
          %1834 = vdwg.mxu0
          %v1836 = vsel %vm1328, %v1741, 0
          %v1839 = vsel %vm1335, %v1412, 0
          %1841 = vmatprep.subr.bf16.mxu0 0
          %1842 = vmatpush1.bf16.msra.mxu0 %v1839
          %1843 = vmatprep.subr.bf16.mxu0 0
          %1844 = vmatpush1.bf16.msra.mxu0 0
          %1845 = vmatprep.subr.bf16.mxu0 0
          %1846 = vmatpush1.bf16.msra.mxu0 0
          %1847 = vmatprep.subr.bf16.mxu0 0
          %1848 = vmatpush1.bf16.msra.mxu0 0
          %1849 = vmatprep.subr.bf16.mxu0 0
          %1850 = vmatpush1.bf16.msra.mxu0 0
          %1851 = vmatprep.subr.bf16.mxu0 0
          %1852 = vmatpush1.bf16.msra.mxu0 0
          %1853 = vmatprep.subr.bf16.mxu0 0
          %1854 = vmatpush1.bf16.msra.mxu0 0
          %1855 = vmatprep.subr.bf16.mxu0 0
          %1856 = vmatpush1.bf16.msra.mxu0 0
          %1857 = vmatprep.subr.bf16.mxu0 0
          %1858 = vmatpush1.bf16.msra.mxu0 0
          %1859 = vmatprep.subr.bf16.mxu0 0
          %1860 = vmatpush1.bf16.msra.mxu0 0
          %1861 = vmatprep.subr.bf16.mxu0 0
          %1862 = vmatpush1.bf16.msra.mxu0 0
          %1863 = vmatprep.subr.bf16.mxu0 0
          %1864 = vmatpush1.bf16.msra.mxu0 0
          %1865 = vmatprep.subr.bf16.mxu0 0
          %1866 = vmatpush1.bf16.msra.mxu0 0
          %1867 = vmatprep.subr.bf16.mxu0 0
          %1868 = vmatpush1.bf16.msra.mxu0 0
          %1869 = vmatprep.subr.bf16.mxu0 0
          %1870 = vmatpush1.bf16.msra.mxu0 0
          %1871 = vmatprep.subr.bf16.mxu0 0
          %1872 = vmatpush1.bf16.msra.mxu0 0
          %1873 = vmatprep.mubr.bf16.mxu0 0
          %1874 = vmatmul.mubr.bf16.gmra.mrb[0].mxu0 %v1836
          %v1875 = vpop.f32.mrb[0].mxu0
          %v1876 = vadd.f32 0.0, %v1875
          %v1877 = vpop.f32.mrb[0].mxu0
          %v1878 = vpop.f32.mrb[0].mxu0
          %v1879 = vpop.f32.mrb[0].mxu0
          %1880 = vdwg.mxu0
          %v1882 = vsel %vm1328, %v1742, 0
          %v1885 = vsel %vm1335, %v1413, 0
          %1887 = vmatprep.subr.bf16.mxu0 0
          %1888 = vmatpush1.bf16.msra.mxu0 %v1885
          %1889 = vmatprep.subr.bf16.mxu0 0
          %1890 = vmatpush1.bf16.msra.mxu0 0
          %1891 = vmatprep.subr.bf16.mxu0 0
          %1892 = vmatpush1.bf16.msra.mxu0 0
          %1893 = vmatprep.subr.bf16.mxu0 0
          %1894 = vmatpush1.bf16.msra.mxu0 0
          %1895 = vmatprep.subr.bf16.mxu0 0
          %1896 = vmatpush1.bf16.msra.mxu0 0
          %1897 = vmatprep.subr.bf16.mxu0 0
          %1898 = vmatpush1.bf16.msra.mxu0 0
          %1899 = vmatprep.subr.bf16.mxu0 0
          %1900 = vmatpush1.bf16.msra.mxu0 0
          %1901 = vmatprep.subr.bf16.mxu0 0
          %1902 = vmatpush1.bf16.msra.mxu0 0
          %1903 = vmatprep.subr.bf16.mxu0 0
          %1904 = vmatpush1.bf16.msra.mxu0 0
          %1905 = vmatprep.subr.bf16.mxu0 0
          %1906 = vmatpush1.bf16.msra.mxu0 0
          %1907 = vmatprep.subr.bf16.mxu0 0
          %1908 = vmatpush1.bf16.msra.mxu0 0
          %1909 = vmatprep.subr.bf16.mxu0 0
          %1910 = vmatpush1.bf16.msra.mxu0 0
          %1911 = vmatprep.subr.bf16.mxu0 0
          %1912 = vmatpush1.bf16.msra.mxu0 0
          %1913 = vmatprep.subr.bf16.mxu0 0
          %1914 = vmatpush1.bf16.msra.mxu0 0
          %1915 = vmatprep.subr.bf16.mxu0 0
          %1916 = vmatpush1.bf16.msra.mxu0 0
          %1917 = vmatprep.subr.bf16.mxu0 0
          %1918 = vmatpush1.bf16.msra.mxu0 0
          %1919 = vmatprep.mubr.bf16.mxu0 0
          %1920 = vmatmul.mubr.bf16.gmra.mrb[0].mxu0 %v1882
          %v1921 = vpop.f32.mrb[0].mxu0
          %v1922 = vadd.f32 0.0, %v1921
          %v1923 = vpop.f32.mrb[0].mxu0
          %v1924 = vpop.f32.mrb[0].mxu0
          %v1925 = vpop.f32.mrb[0].mxu0
          %1926 = vdwg.mxu0
          %v1927 = vadd.f32 %v1735, %v1784
          %v1928 = vadd.f32 %v1736, %v1830
          %v1929 = vadd.f32 %v1737, %v1876
          %v1930 = vadd.f32 %v1738, %v1922
          %1931 = vst.msk [vmem:[#allocation5] sm:$0xff] %vm1328, %v1927
          %1932 = vst.msk [vmem:[#allocation5 + $0x8] sm:$0xff] %vm1328, %v1928
          %1933 = vst.msk [vmem:[#allocation5 + $0x10] sm:$0xff] %vm1328, %v1929
          %1934 = vst.msk [vmem:[#allocation5 + $0x18] sm:$0xff] %vm1328, %v1930
          %1935 = vst.msk [vmem:[#allocation3] sm:$0xff] %vm1706, %v1634
          %1936 = vst.msk [vmem:[#allocation3 + $0x8] sm:$0xff] %vm1706, %v1635
          %1937 = vst.msk [vmem:[#allocation3 + $0x10] sm:$0xff] %vm1706, %v1636
          %1938 = vst.msk [vmem:[#allocation3 + $0x18] sm:$0xff] %vm1706, %v1637
        $region84: #{tpu_custom_call.1} parent=51 // pred_fallthru
          _
        // Predicated region
        $region85: #{tpu_custom_call.1} parent=51 // pred_check
          %p1939 = pneg %p563
        $region86: #{tpu_custom_call.1} parent=51 // pred_check_branch
          %1941 = sbr.rel (%p1939) target = $region88
        $region87: #{tpu_custom_call.1} parent=51 // pred_region
          %v1942 = vld [vmem:[#allocation5] sm:$0xff]
          %v1943 = vld [vmem:[#allocation5 + $0x8] sm:$0xff]
          %v1944 = vld [vmem:[#allocation5 + $0x10] sm:$0xff]
          %v1945 = vld [vmem:[#allocation5 + $0x18] sm:$0xff]
          %v1946 = vld [vmem:[#allocation4] sm:$0xff]
          %v1947 = vld [vmem:[#allocation4 + $0x8] sm:$0xff]
          %v1948 = vld [vmem:[#allocation4 + $0x10] sm:$0xff]
          %v1949 = vld [vmem:[#allocation4 + $0x18] sm:$0xff]
          %v1950 = vrcp.pop %v1946
          %v1951 = vrcp.pop %v1947
          %v1952 = vrcp.pop %v1948
          %v1953 = vrcp.pop %v1949
          %1955 = vset.pattern.permute.xlu0 0
          %1956 = vperm.xlu0 %1955, %v1950
          %v1957 = vpop.permute.xlu0 %1956
          %1960 = vset.pattern.permute.xlu0 0
          %1961 = vperm.xlu0 %1960, %v1951
          %v1962 = vpop.permute.xlu0 %1961
          %1965 = vset.pattern.permute.xlu0 0
          %1966 = vperm.xlu0 %1965, %v1952
          %v1967 = vpop.permute.xlu0 %1966
          %1970 = vset.pattern.permute.xlu0 0
          %1971 = vperm.xlu0 %1970, %v1953
          %v1972 = vpop.permute.xlu0 %1971
          %v1974 = vmul.f32 %v1942, %v1957
          %v1975 = vmul.f32 %v1943, %v1962
          %v1976 = vmul.f32 %v1944, %v1967
          %v1977 = vmul.f32 %v1945, %v1972
          %v1978 = vpack.c.bf16 %v1974, %v1974
          %v1979 = vpack.c.bf16 %v1975, %v1975
          %v1980 = vpack.c.bf16 %v1976, %v1976
          %v1981 = vpack.c.bf16 %v1977, %v1977
          %vm1982 = vcmask 60416
          %1983 = vst.msk [vmem:[%s537] sm:$0xf] %vm1982, %v1978
          %1984 = vst.msk [vmem:[%s537 + $0x4] sm:$0xf] %vm1982, %v1979
          %1985 = vst.msk [vmem:[%s537 + $0x8] sm:$0xf] %vm1982, %v1980
          %1986 = vst.msk [vmem:[%s537 + $0xc] sm:$0xf] %vm1982, %v1981
        $region88: #{tpu_custom_call.1} parent=51 // pred_fallthru
          _
        %s1987 = sand.u32 %s291, 1
        %s1988 = scalar_lea.sflag [#allocation8], %s1987
        %s1989 = sand.u32 %s291, 1
        %s1990 = smul.addr %s1989, 16
        %s1991 = scalar_lea.vmem [#allocation15], %s1990
        // Predicated region
        $region89: #{tpu_custom_call.1} parent=51 // pred_check
          %p1992 = pneg %p301
        $region90: #{tpu_custom_call.1} parent=51 // pred_check_branch
          %1994 = sbr.rel (%p1992) target = $region92
        $region91: #{tpu_custom_call.1} parent=51 // pred_region
          %s1996 = ssub.s32 256, 256
          %1997 = vsyncadd %s1988, %s1996
          %s1998 = smul.addr %s34, 4
          %s1999 = sadd.s32 %s35, %s1998
          %s2000 = smul.addr %s1999, 64
          %s2001 = scalar_lea.hbm %s8, %s2000
          %s2002 = sshll.u32 %s1991, 4
          %s2003 = int_to_ptr.vmem [resolvable:$true] %s2002
          %2008 = dma.vmem_to_hbm [thread:$0]  %s2003, 256, %s2001, %s1988, 64, 64, 4
        $region92: #{tpu_custom_call.1} parent=51 // pred_fallthru
          _
      $region52: #{tpu_custom_call.1} parent=5 // pred_fallthru
        _
      %p2009 = scmp.le.s32.totalorder 2, %s24
      // Predicated region
      $region93: #{tpu_custom_call.1} parent=5 // pred_check
        %p2010 = pneg %p2009
      $region94: #{tpu_custom_call.1} parent=5 // pred_check_branch
        %2012 = sbr.rel (%p2010) target = $region96
      $region95: #{tpu_custom_call.1} parent=5 // pred_region
        %s2013 = ssub.s32 %s24, 2
        // Predicated region
        $region97: #{tpu_custom_call.1} parent=95 // pred_check
          %p2014 = pneg %p307
        $region98: #{tpu_custom_call.1} parent=95 // pred_check_branch
          %2016 = sbr.rel (%p2014) target = $region100
        $region99: #{tpu_custom_call.1} parent=95 // pred_region
          %s2017 = sand.u32 %s292, 1
          %s2018 = scalar_lea.sflag [#allocation8], %s2017
          %s2019 = sand.u32 %s292, 1
          %s2020 = smul.addr %s2019, 16
          %s2021 = scalar_lea.vmem [#allocation15], %s2020
          %2022 = dma.done %s2018, 256
        $region100: #{tpu_custom_call.1} parent=95 // pred_fallthru
          _
      $region96: #{tpu_custom_call.1} parent=5 // pred_fallthru
        _
    $region6: #{tpu_custom_call.1} parent=1 // loop_footer
      %s28 = sadd.s32 1, %s24
    $region7: #{tpu_custom_call.1} parent=1 // loop_footer_branch
      %23 = sbr.rel target = $region3
    $region8: #{tpu_custom_call.1} parent=1 // loop_exit
      _
    %2023 = vsyncpa [#allocation7], 1
    %s2024 = scalar_lea.sflag [#allocation7], 1
    %2025 = vsyncpa %s2024, 1
    %2026 = vsyncpa [#allocation10], 1
    %s2027 = scalar_lea.sflag [#allocation10], 1
    %2028 = vsyncpa %s2027, 1
    %2029 = vsyncpa [#allocation13], 1
    %2030 = vsyncpa [#allocation8], 1
    %s2031 = scalar_lea.sflag [#allocation8], 1
    %2032 = vsyncpa %s2031, 1

</llo_original>
